<compile_context>
chip_gen: v6e
topology: v6e:2x2x1
jax: 0.10.0
libtpu: 0.0.40
codegen_flags: <defaults>
</compile_context>

<pallas_src>
import jax
import jax.numpy as jnp
from jax.experimental import pallas as pl
from jax.experimental.pallas import tpu as pltpu


def _conv1d_same_nct(h, w_ref, b, lane_idx, T):
    """'same' (K//2 zero-padded) Conv1d in NCT layout.

    h:      (Ci, T) f32, already masked.
    w_ref:  Ref (K, Co, Ci); w_ref[k] == torch_weight[:, :, k]  (cross-corr tap).
    b:      (Co, 1) f32 bias.
    Returns (Co, T) f32.
    """
    K, Co, _ = w_ref.shape
    pad = K // 2
    h_b = h.astype(jnp.bfloat16)
    acc = jnp.zeros((Co, T), dtype=jnp.float32)
    for tap in range(K):                               # static unroll over taps
        y = jnp.dot(w_ref[tap].astype(jnp.bfloat16), h_b,
                    preferred_element_type=jnp.float32)        # (Co, T) on MXU
        shift = pad - tap
        if shift != 0:
            y = pltpu.roll(y, shift=shift % T, axis=1)          # XLU lane roll
            if shift > 0:      # wrapped columns correspond to t < 0 (zero pad)
                y = jnp.where(lane_idx < shift, 0.0, y)
            else:              # wrapped columns correspond to t >= T (zero pad)
                y = jnp.where(lane_idx >= T + shift, 0.0, y)
        acc = acc + y
    return acc + b


def _layer_norm_c(h, gamma, beta, eps=1e-5):
    """LayerNorm over the channel (sublane) axis -- matches VITS modules.LayerNorm."""
    mu = jnp.mean(h, axis=0, keepdims=True)
    var = jnp.mean(jnp.square(h - mu), axis=0, keepdims=True)
    return (h - mu) * jax.lax.rsqrt(var + eps) * gamma + beta


def duration_predictor_kernel(x_ref, m_ref,
                              w1_ref, b1_ref, g1_ref, be1_ref,
                              w2_ref, b2_ref, g2_ref, be2_ref,
                              wp_ref, bp_ref,
                              o_ref):
    T = x_ref.shape[2]
    x = x_ref[0]                                    # (Cin, T)
    m = m_ref[0]                                    # (1, T)
    lane = jax.lax.broadcasted_iota(jnp.int32, (1, T), 1)

    # conv_1(x * mask) -> relu -> LayerNorm -> (dropout = identity)
    h = _conv1d_same_nct(x * m, w1_ref, b1_ref[...], lane, T)
    h = jnp.maximum(h, 0.0)
    h = _layer_norm_c(h, g1_ref[...], be1_ref[...])

    # conv_2(h * mask) -> relu -> LayerNorm -> (dropout = identity)
    h = _conv1d_same_nct(h * m, w2_ref, b2_ref[...], lane, T)
    h = jnp.maximum(h, 0.0)
    h = _layer_norm_c(h, g2_ref[...], be2_ref[...])

    # proj (1x1 conv, Fc -> 1): VPU multiply + sublane reduction (no N=1 matmul)
    out = jnp.sum((h * m) * wp_ref[...], axis=0, keepdims=True) + bp_ref[...]
    o_ref[0] = (out * m).astype(o_ref.dtype)        # lane-dense (1, T) store


def duration_predictor(x_nct, mask_n1t, params):
    """x_nct: (B, Cin, T) f32, mask_n1t: (B, 1, T) f32 -> (B, 1, T) f32."""
    B, Cin, T = x_nct.shape
    K, Fc, _ = params["w1"].shape
    # pad = K//2 zero padding only matches PyTorch 'same' alignment for odd K
    assert K % 2 == 1, "only odd kernel_size reproduces PyTorch padding=kernel_size//2"
    assert K // 2 < T

    def full(shape):
        # whole (untiled) array, replicated across the batch grid
        return pl.BlockSpec(shape, lambda b, _n=len(shape): (0,) * _n)

    grid_spec = pltpu.PrefetchScalarGridSpec(
        num_scalar_prefetch=0,
        grid=(B,),
        in_specs=[
            pl.BlockSpec((1, Cin, T), lambda b: (b, 0, 0)),   # x        (NCT)
            pl.BlockSpec((1, 1, T),   lambda b: (b, 0, 0)),   # mask
            full((K, Fc, Cin)), full((Fc, 1)),                # conv_1 w, b
            full((Fc, 1)), full((Fc, 1)),                     # norm_1 gamma, beta
            full((K, Fc, Fc)), full((Fc, 1)),                 # conv_2 w, b
            full((Fc, 1)), full((Fc, 1)),                     # norm_2 gamma, beta
            full((Fc, 1)), full((1, 1)),                      # proj w, b
        ],
        out_specs=pl.BlockSpec((1, 1, T), lambda b: (b, 0, 0)),
    )

    args = (x_nct, mask_n1t,
            params["w1"], params["b1"], params["g1"], params["be1"],
            params["w2"], params["b2"], params["g2"], params["be2"],
            params["wp"], params["bp"])

    # Advisory cost estimate so XLA schedules surrounding ops sensibly.
    flops = 2 * B * T * (K * Cin * Fc + K * Fc * Fc + Fc) + 12 * B * T * Fc
    bytes_accessed = sum(int(a.size) * a.dtype.itemsize for a in args) + B * T * 4
    cost = pl.CostEstimate(flops=flops, transcendentals=2 * B * T,
                           bytes_accessed=bytes_accessed)

    return pl.pallas_call(
        duration_predictor_kernel,
        out_shape=jax.ShapeDtypeStruct((B, 1, T), jnp.float32),
        grid_spec=grid_spec,
        compiler_params=pltpu.CompilerParams(
            dimension_semantics=("parallel",),
            vmem_limit_bytes=32 * 1024 * 1024,
        ),
        cost_estimate=cost,
    )(*args)


def init_params(key, in_channels, filter_channels, kernel_size):
    ks = jax.random.split(key, 6)
    s = 0.1
    return {
        # conv_1: PyTorch weight (F, Cin, K) stored here as (K, F, Cin); bf16 MXU operand.
        "w1": (s * jax.random.normal(
            ks[0], (kernel_size, filter_channels, in_channels), jnp.float32)
            ).astype(jnp.bfloat16),
        "b1": s * jax.random.normal(ks[1], (filter_channels, 1), jnp.float32),
        "g1": jnp.ones((filter_channels, 1), jnp.float32),
        "be1": jnp.zeros((filter_channels, 1), jnp.float32),
        # conv_2: (K, F, F)
        "w2": (s * jax.random.normal(
            ks[2], (kernel_size, filter_channels, filter_channels), jnp.float32)
            ).astype(jnp.bfloat16),
        "b2": s * jax.random.normal(ks[3], (filter_channels, 1), jnp.float32),
        "g2": jnp.ones((filter_channels, 1), jnp.float32),
        "be2": jnp.zeros((filter_channels, 1), jnp.float32),
        # proj (1x1 conv, F -> 1): applied as VPU multiply + reduce, kept f32.
        "wp": s * jax.random.normal(ks[4], (filter_channels, 1), jnp.float32),
        "bp": s * jax.random.normal(ks[5], (1, 1), jnp.float32),
    }


if __name__ == "__main__":
    B, Cin, Fc, K, T = 2, 16, 32, 3, 16

    key = jax.random.PRNGKey(0)
    k_x, k_p = jax.random.split(key)

    x = jax.random.normal(k_x, (B, Cin, T), jnp.float32)        # PyTorch NCT layout
    # simple valid-length mask: first sequence full, second half-length
    lengths = jnp.array([T, T // 2])
    mask = (jnp.arange(T)[None, :] < lengths[:, None]).astype(jnp.float32)[:, None, :]  # (B, 1, T)

    params = init_params(k_p, Cin, Fc, K)

    out = duration_predictor(x, mask, params)
    out = jax.block_until_ready(out)
    assert out.shape == (B, 1, T), out.shape
    print("KERNEL_OK")
</pallas_src>

<mosaic_0001>
module attributes {stable_mosaic.version = 11 : i64} {
  func.func @duration_predictor_kernel(%arg0: i32, %arg1: memref<1x16x16xf32, #tpu.memory_space<vmem>>, %arg2: memref<1x1x16xf32, #tpu.memory_space<vmem>>, %arg3: memref<3x32x16xbf16, #tpu.memory_space<vmem>>, %arg4: memref<32x1xf32, #tpu.memory_space<vmem>>, %arg5: memref<32x1xf32, #tpu.memory_space<vmem>>, %arg6: memref<32x1xf32, #tpu.memory_space<vmem>>, %arg7: memref<3x32x32xbf16, #tpu.memory_space<vmem>>, %arg8: memref<32x1xf32, #tpu.memory_space<vmem>>, %arg9: memref<32x1xf32, #tpu.memory_space<vmem>>, %arg10: memref<32x1xf32, #tpu.memory_space<vmem>>, %arg11: memref<32x1xf32, #tpu.memory_space<vmem>>, %arg12: memref<1x1xf32, #tpu.memory_space<vmem>>, %arg13: memref<1x1x16xf32, #tpu.memory_space<vmem>>) attributes {dimension_semantics = [#tpu.dimension_semantics<parallel>], iteration_bounds = array<i64: 2>, scalar_prefetch = 0 : i64, scratch_operands = 0 : i64, tpu.core_type = #tpu.core_type<tc>, window_params = [{transform_indices = @transform_0, window_bounds = array<i64: 1, 16, 16>}, {transform_indices = @transform_1, window_bounds = array<i64: 1, 1, 16>}, {pipeline_mode = #tpu.pipeline_mode<synchronous>, transform_indices = @transform_2, window_bounds = array<i64: 3, 32, 16>}, {pipeline_mode = #tpu.pipeline_mode<synchronous>, transform_indices = @transform_3, window_bounds = array<i64: 32, 1>}, {pipeline_mode = #tpu.pipeline_mode<synchronous>, transform_indices = @transform_4, window_bounds = array<i64: 32, 1>}, {pipeline_mode = #tpu.pipeline_mode<synchronous>, transform_indices = @transform_5, window_bounds = array<i64: 32, 1>}, {pipeline_mode = #tpu.pipeline_mode<synchronous>, transform_indices = @transform_6, window_bounds = array<i64: 3, 32, 32>}, {pipeline_mode = #tpu.pipeline_mode<synchronous>, transform_indices = @transform_7, window_bounds = array<i64: 32, 1>}, {pipeline_mode = #tpu.pipeline_mode<synchronous>, transform_indices = @transform_8, window_bounds = array<i64: 32, 1>}, {pipeline_mode = #tpu.pipeline_mode<synchronous>, transform_indices = @transform_9, window_bounds = array<i64: 32, 1>}, {pipeline_mode = #tpu.pipeline_mode<synchronous>, transform_indices = @transform_10, window_bounds = array<i64: 32, 1>}, {pipeline_mode = #tpu.pipeline_mode<synchronous>, transform_indices = @transform_11, window_bounds = array<i64: 1, 1>}, {transform_indices = @transform_12, window_bounds = array<i64: 1, 1, 16>}]} {
    %c0 = arith.constant 0 : index
    %c0_0 = arith.constant 0 : index
    %c0_1 = arith.constant 0 : index
    %0 = vector.load %arg1[%c0, %c0_0, %c0_1] : memref<1x16x16xf32, #tpu.memory_space<vmem>>, vector<1x16x16xf32>
    %1 = vector.shape_cast %0 : vector<1x16x16xf32> to vector<16x16xf32>
    %c0_2 = arith.constant 0 : index
    %c0_3 = arith.constant 0 : index
    %c0_4 = arith.constant 0 : index
    %2 = vector.load %arg2[%c0_2, %c0_3, %c0_4] : memref<1x1x16xf32, #tpu.memory_space<vmem>>, vector<1x1x16xf32>
    %3 = vector.shape_cast %2 : vector<1x1x16xf32> to vector<1x16xf32>
    %4 = tpu.iota {dimensions = array<i32: 1>} : vector<1x16xi32>
    %5 = vector.broadcast %3 : vector<1x16xf32> to vector<16x16xf32>
    %6 = arith.mulf %1, %5 : vector<16x16xf32>
    %c0_5 = arith.constant 0 : index
    %c0_6 = arith.constant 0 : index
    %7 = vector.load %arg4[%c0_5, %c0_6] : memref<32x1xf32, #tpu.memory_space<vmem>>, vector<32x1xf32>
    %8 = arith.truncf %6 : vector<16x16xf32> to vector<16x16xbf16>
    %cst = arith.constant 0.000000e+00 : f32
    %9 = vector.broadcast %cst : f32 to vector<32x16xf32>
    %c0_7 = arith.constant 0 : index
    %c0_8 = arith.constant 0 : index
    %c0_9 = arith.constant 0 : index
    %10 = vector.load %arg3[%c0_7, %c0_8, %c0_9] : memref<3x32x16xbf16, #tpu.memory_space<vmem>>, vector<1x32x16xbf16>
    %11 = vector.shape_cast %10 : vector<1x32x16xbf16> to vector<32x16xbf16>
    %cst_10 = arith.constant dense<0.000000e+00> : vector<32x16xf32>
    %12 = tpu.matmul %11, %8, %cst_10 {dimension_numbers = #tpu.dot_dimension_numbers<[1], [0], [0], [1], [0, 0, 1, 1], [], []>} : vector<32x16xbf16>, vector<16x16xbf16>, vector<32x16xf32> -> vector<32x16xf32>
    %c1_i32 = arith.constant 1 : i32
    %13 = tpu.dynamic_rotate %12 by %c1_i32 dim 1 : vector<32x16xf32>, i32 -> vector<32x16xf32>
    %c1_i32_11 = arith.constant 1 : i32
    %14 = vector.broadcast %c1_i32_11 : i32 to vector<1x16xi32>
    %15 = arith.cmpi slt, %4, %14 : vector<1x16xi32>
    %cst_12 = arith.constant 0.000000e+00 : f32
    %16 = vector.shape_cast %15 : vector<1x16xi1> to vector<1x16xi1>
    %17 = vector.broadcast %16 : vector<1x16xi1> to vector<32x16xi1>
    %18 = vector.broadcast %cst_12 : f32 to vector<32x16xf32>
    %19 = arith.select %17, %18, %13 : vector<32x16xi1>, vector<32x16xf32>
    %20 = arith.addf %9, %19 : vector<32x16xf32>
    %c1 = arith.constant 1 : index
    %c0_13 = arith.constant 0 : index
    %c0_14 = arith.constant 0 : index
    %21 = vector.load %arg3[%c1, %c0_13, %c0_14] : memref<3x32x16xbf16, #tpu.memory_space<vmem>>, vector<1x32x16xbf16>
    %22 = vector.shape_cast %21 : vector<1x32x16xbf16> to vector<32x16xbf16>
    %cst_15 = arith.constant dense<0.000000e+00> : vector<32x16xf32>
    %23 = tpu.matmul %22, %8, %cst_15 {dimension_numbers = #tpu.dot_dimension_numbers<[1], [0], [0], [1], [0, 0, 1, 1], [], []>} : vector<32x16xbf16>, vector<16x16xbf16>, vector<32x16xf32> -> vector<32x16xf32>
    %24 = arith.addf %20, %23 : vector<32x16xf32>
    %c2 = arith.constant 2 : index
    %c0_16 = arith.constant 0 : index
    %c0_17 = arith.constant 0 : index
    %25 = vector.load %arg3[%c2, %c0_16, %c0_17] : memref<3x32x16xbf16, #tpu.memory_space<vmem>>, vector<1x32x16xbf16>
    %26 = vector.shape_cast %25 : vector<1x32x16xbf16> to vector<32x16xbf16>
    %cst_18 = arith.constant dense<0.000000e+00> : vector<32x16xf32>
    %27 = tpu.matmul %26, %8, %cst_18 {dimension_numbers = #tpu.dot_dimension_numbers<[1], [0], [0], [1], [0, 0, 1, 1], [], []>} : vector<32x16xbf16>, vector<16x16xbf16>, vector<32x16xf32> -> vector<32x16xf32>
    %c15_i32 = arith.constant 15 : i32
    %28 = tpu.dynamic_rotate %27 by %c15_i32 dim 1 : vector<32x16xf32>, i32 -> vector<32x16xf32>
    %c15_i32_19 = arith.constant 15 : i32
    %29 = vector.broadcast %c15_i32_19 : i32 to vector<1x16xi32>
    %30 = arith.cmpi sge, %4, %29 : vector<1x16xi32>
    %cst_20 = arith.constant 0.000000e+00 : f32
    %31 = vector.shape_cast %30 : vector<1x16xi1> to vector<1x16xi1>
    %32 = vector.broadcast %31 : vector<1x16xi1> to vector<32x16xi1>
    %33 = vector.broadcast %cst_20 : f32 to vector<32x16xf32>
    %34 = arith.select %32, %33, %28 : vector<32x16xi1>, vector<32x16xf32>
    %35 = arith.addf %24, %34 : vector<32x16xf32>
    %36 = vector.broadcast %7 : vector<32x1xf32> to vector<32x16xf32>
    %37 = arith.addf %35, %36 : vector<32x16xf32>
    %cst_21 = arith.constant 0.000000e+00 : f32
    %38 = vector.broadcast %cst_21 : f32 to vector<32x16xf32>
    %39 = arith.maximumf %37, %38 : vector<32x16xf32>
    %c0_22 = arith.constant 0 : index
    %c0_23 = arith.constant 0 : index
    %40 = vector.load %arg5[%c0_22, %c0_23] : memref<32x1xf32, #tpu.memory_space<vmem>>, vector<32x1xf32>
    %c0_24 = arith.constant 0 : index
    %c0_25 = arith.constant 0 : index
    %41 = vector.load %arg6[%c0_24, %c0_25] : memref<32x1xf32, #tpu.memory_space<vmem>>, vector<32x1xf32>
    %cst_26 = arith.constant dense<0.000000e+00> : vector<16xf32>
    %42 = vector.multi_reduction <add>, %39, %cst_26 [0] : vector<32x16xf32> to vector<16xf32>
    %43 = vector.shape_cast %42 : vector<16xf32> to vector<1x16xf32>
    %cst_27 = arith.constant 3.200000e+01 : f32
    %44 = vector.broadcast %cst_27 : f32 to vector<1x16xf32>
    %45 = arith.divf %43, %44 : vector<1x16xf32>
    %46 = vector.broadcast %45 : vector<1x16xf32> to vector<32x16xf32>
    %47 = arith.subf %39, %46 : vector<32x16xf32>
    %48 = arith.mulf %47, %47 : vector<32x16xf32>
    %cst_28 = arith.constant dense<0.000000e+00> : vector<16xf32>
    %49 = vector.multi_reduction <add>, %48, %cst_28 [0] : vector<32x16xf32> to vector<16xf32>
    %50 = vector.shape_cast %49 : vector<16xf32> to vector<1x16xf32>
    %cst_29 = arith.constant 3.200000e+01 : f32
    %51 = vector.broadcast %cst_29 : f32 to vector<1x16xf32>
    %52 = arith.divf %50, %51 : vector<1x16xf32>
    %53 = vector.broadcast %45 : vector<1x16xf32> to vector<32x16xf32>
    %54 = arith.subf %39, %53 : vector<32x16xf32>
    %cst_30 = arith.constant 9.99999974E-6 : f32
    %55 = vector.broadcast %cst_30 : f32 to vector<1x16xf32>
    %56 = arith.addf %52, %55 : vector<1x16xf32>
    %57 = math.rsqrt %56 : vector<1x16xf32>
    %58 = vector.broadcast %57 : vector<1x16xf32> to vector<32x16xf32>
    %59 = arith.mulf %54, %58 : vector<32x16xf32>
    %60 = vector.broadcast %40 : vector<32x1xf32> to vector<32x16xf32>
    %61 = arith.mulf %59, %60 : vector<32x16xf32>
    %62 = vector.broadcast %41 : vector<32x1xf32> to vector<32x16xf32>
    %63 = arith.addf %61, %62 : vector<32x16xf32>
    %64 = vector.broadcast %3 : vector<1x16xf32> to vector<32x16xf32>
    %65 = arith.mulf %63, %64 : vector<32x16xf32>
    %c0_31 = arith.constant 0 : index
    %c0_32 = arith.constant 0 : index
    %66 = vector.load %arg8[%c0_31, %c0_32] : memref<32x1xf32, #tpu.memory_space<vmem>>, vector<32x1xf32>
    %67 = arith.truncf %65 : vector<32x16xf32> to vector<32x16xbf16>
    %cst_33 = arith.constant 0.000000e+00 : f32
    %68 = vector.broadcast %cst_33 : f32 to vector<32x16xf32>
    %c0_34 = arith.constant 0 : index
    %c0_35 = arith.constant 0 : index
    %c0_36 = arith.constant 0 : index
    %69 = vector.load %arg7[%c0_34, %c0_35, %c0_36] : memref<3x32x32xbf16, #tpu.memory_space<vmem>>, vector<1x32x32xbf16>
    %70 = vector.shape_cast %69 : vector<1x32x32xbf16> to vector<32x32xbf16>
    %cst_37 = arith.constant dense<0.000000e+00> : vector<32x16xf32>
    %71 = tpu.matmul %70, %67, %cst_37 {dimension_numbers = #tpu.dot_dimension_numbers<[1], [0], [0], [1], [0, 0, 1, 1], [], []>} : vector<32x32xbf16>, vector<32x16xbf16>, vector<32x16xf32> -> vector<32x16xf32>
    %c1_i32_38 = arith.constant 1 : i32
    %72 = tpu.dynamic_rotate %71 by %c1_i32_38 dim 1 : vector<32x16xf32>, i32 -> vector<32x16xf32>
    %c1_i32_39 = arith.constant 1 : i32
    %73 = vector.broadcast %c1_i32_39 : i32 to vector<1x16xi32>
    %74 = arith.cmpi slt, %4, %73 : vector<1x16xi32>
    %cst_40 = arith.constant 0.000000e+00 : f32
    %75 = vector.shape_cast %74 : vector<1x16xi1> to vector<1x16xi1>
    %76 = vector.broadcast %75 : vector<1x16xi1> to vector<32x16xi1>
    %77 = vector.broadcast %cst_40 : f32 to vector<32x16xf32>
    %78 = arith.select %76, %77, %72 : vector<32x16xi1>, vector<32x16xf32>
    %79 = arith.addf %68, %78 : vector<32x16xf32>
    %c1_41 = arith.constant 1 : index
    %c0_42 = arith.constant 0 : index
    %c0_43 = arith.constant 0 : index
    %80 = vector.load %arg7[%c1_41, %c0_42, %c0_43] : memref<3x32x32xbf16, #tpu.memory_space<vmem>>, vector<1x32x32xbf16>
    %81 = vector.shape_cast %80 : vector<1x32x32xbf16> to vector<32x32xbf16>
    %cst_44 = arith.constant dense<0.000000e+00> : vector<32x16xf32>
    %82 = tpu.matmul %81, %67, %cst_44 {dimension_numbers = #tpu.dot_dimension_numbers<[1], [0], [0], [1], [0, 0, 1, 1], [], []>} : vector<32x32xbf16>, vector<32x16xbf16>, vector<32x16xf32> -> vector<32x16xf32>
    %83 = arith.addf %79, %82 : vector<32x16xf32>
    %c2_45 = arith.constant 2 : index
    %c0_46 = arith.constant 0 : index
    %c0_47 = arith.constant 0 : index
    %84 = vector.load %arg7[%c2_45, %c0_46, %c0_47] : memref<3x32x32xbf16, #tpu.memory_space<vmem>>, vector<1x32x32xbf16>
    %85 = vector.shape_cast %84 : vector<1x32x32xbf16> to vector<32x32xbf16>
    %cst_48 = arith.constant dense<0.000000e+00> : vector<32x16xf32>
    %86 = tpu.matmul %85, %67, %cst_48 {dimension_numbers = #tpu.dot_dimension_numbers<[1], [0], [0], [1], [0, 0, 1, 1], [], []>} : vector<32x32xbf16>, vector<32x16xbf16>, vector<32x16xf32> -> vector<32x16xf32>
    %c15_i32_49 = arith.constant 15 : i32
    %87 = tpu.dynamic_rotate %86 by %c15_i32_49 dim 1 : vector<32x16xf32>, i32 -> vector<32x16xf32>
    %c15_i32_50 = arith.constant 15 : i32
    %88 = vector.broadcast %c15_i32_50 : i32 to vector<1x16xi32>
    %89 = arith.cmpi sge, %4, %88 : vector<1x16xi32>
    %cst_51 = arith.constant 0.000000e+00 : f32
    %90 = vector.shape_cast %89 : vector<1x16xi1> to vector<1x16xi1>
    %91 = vector.broadcast %90 : vector<1x16xi1> to vector<32x16xi1>
    %92 = vector.broadcast %cst_51 : f32 to vector<32x16xf32>
    %93 = arith.select %91, %92, %87 : vector<32x16xi1>, vector<32x16xf32>
    %94 = arith.addf %83, %93 : vector<32x16xf32>
    %95 = vector.broadcast %66 : vector<32x1xf32> to vector<32x16xf32>
    %96 = arith.addf %94, %95 : vector<32x16xf32>
    %cst_52 = arith.constant 0.000000e+00 : f32
    %97 = vector.broadcast %cst_52 : f32 to vector<32x16xf32>
    %98 = arith.maximumf %96, %97 : vector<32x16xf32>
    %c0_53 = arith.constant 0 : index
    %c0_54 = arith.constant 0 : index
    %99 = vector.load %arg9[%c0_53, %c0_54] : memref<32x1xf32, #tpu.memory_space<vmem>>, vector<32x1xf32>
    %c0_55 = arith.constant 0 : index
    %c0_56 = arith.constant 0 : index
    %100 = vector.load %arg10[%c0_55, %c0_56] : memref<32x1xf32, #tpu.memory_space<vmem>>, vector<32x1xf32>
    %cst_57 = arith.constant dense<0.000000e+00> : vector<16xf32>
    %101 = vector.multi_reduction <add>, %98, %cst_57 [0] : vector<32x16xf32> to vector<16xf32>
    %102 = vector.shape_cast %101 : vector<16xf32> to vector<1x16xf32>
    %cst_58 = arith.constant 3.200000e+01 : f32
    %103 = vector.broadcast %cst_58 : f32 to vector<1x16xf32>
    %104 = arith.divf %102, %103 : vector<1x16xf32>
    %105 = vector.broadcast %104 : vector<1x16xf32> to vector<32x16xf32>
    %106 = arith.subf %98, %105 : vector<32x16xf32>
    %107 = arith.mulf %106, %106 : vector<32x16xf32>
    %cst_59 = arith.constant dense<0.000000e+00> : vector<16xf32>
    %108 = vector.multi_reduction <add>, %107, %cst_59 [0] : vector<32x16xf32> to vector<16xf32>
    %109 = vector.shape_cast %108 : vector<16xf32> to vector<1x16xf32>
    %cst_60 = arith.constant 3.200000e+01 : f32
    %110 = vector.broadcast %cst_60 : f32 to vector<1x16xf32>
    %111 = arith.divf %109, %110 : vector<1x16xf32>
    %112 = vector.broadcast %104 : vector<1x16xf32> to vector<32x16xf32>
    %113 = arith.subf %98, %112 : vector<32x16xf32>
    %cst_61 = arith.constant 9.99999974E-6 : f32
    %114 = vector.broadcast %cst_61 : f32 to vector<1x16xf32>
    %115 = arith.addf %111, %114 : vector<1x16xf32>
    %116 = math.rsqrt %115 : vector<1x16xf32>
    %117 = vector.broadcast %116 : vector<1x16xf32> to vector<32x16xf32>
    %118 = arith.mulf %113, %117 : vector<32x16xf32>
    %119 = vector.broadcast %99 : vector<32x1xf32> to vector<32x16xf32>
    %120 = arith.mulf %118, %119 : vector<32x16xf32>
    %121 = vector.broadcast %100 : vector<32x1xf32> to vector<32x16xf32>
    %122 = arith.addf %120, %121 : vector<32x16xf32>
    %123 = vector.broadcast %3 : vector<1x16xf32> to vector<32x16xf32>
    %124 = arith.mulf %122, %123 : vector<32x16xf32>
    %c0_62 = arith.constant 0 : index
    %c0_63 = arith.constant 0 : index
    %125 = vector.load %arg11[%c0_62, %c0_63] : memref<32x1xf32, #tpu.memory_space<vmem>>, vector<32x1xf32>
    %126 = vector.broadcast %125 : vector<32x1xf32> to vector<32x16xf32>
    %127 = arith.mulf %124, %126 : vector<32x16xf32>
    %cst_64 = arith.constant dense<0.000000e+00> : vector<16xf32>
    %128 = vector.multi_reduction <add>, %127, %cst_64 [0] : vector<32x16xf32> to vector<16xf32>
    %129 = vector.shape_cast %128 : vector<16xf32> to vector<1x16xf32>
    %c0_65 = arith.constant 0 : index
    %c0_66 = arith.constant 0 : index
    %130 = vector.load %arg12[%c0_65, %c0_66] : memref<1x1xf32, #tpu.memory_space<vmem>>, vector<1x1xf32>
    %131 = vector.broadcast %130 : vector<1x1xf32> to vector<1x16xf32>
    %132 = arith.addf %129, %131 : vector<1x16xf32>
    %133 = arith.mulf %132, %3 : vector<1x16xf32>
    %c0_67 = arith.constant 0 : index
    %c0_68 = arith.constant 0 : index
    %c0_69 = arith.constant 0 : index
    %134 = vector.load %arg13[%c0_67, %c0_68, %c0_69] : memref<1x1x16xf32, #tpu.memory_space<vmem>>, vector<1x1x16xf32>
    %135 = vector.shape_cast %134 : vector<1x1x16xf32> to vector<1x16xf32>
    %136 = vector.shape_cast %133 : vector<1x16xf32> to vector<1x1x16xf32>
    tpu.vector_store %arg13[%c0_67, %c0_68, %c0_69], %136 {strides = array<i32>} : memref<1x1x16xf32, #tpu.memory_space<vmem>>, vector<1x1x16xf32>,
    return
  }
  func.func @transform_0(%arg0: i32) -> (i32, i32, i32) {
    %c0_i32 = arith.constant 0 : i32
    %c0_i32_0 = arith.constant 0 : i32
    %c0_i32_1 = arith.constant 0 : i32
    return %arg0, %c0_i32, %c0_i32_0 : i32, i32, i32
  }
  func.func @transform_1(%arg0: i32) -> (i32, i32, i32) {
    %c0_i32 = arith.constant 0 : i32
    %c0_i32_0 = arith.constant 0 : i32
    %c0_i32_1 = arith.constant 0 : i32
    return %arg0, %c0_i32, %c0_i32_0 : i32, i32, i32
  }
  func.func @transform_2(%arg0: i32) -> (i32, i32, i32) {
    %c0_i32 = arith.constant 0 : i32
    %c0_i32_0 = arith.constant 0 : i32
    %c0_i32_1 = arith.constant 0 : i32
    %c0_i32_2 = arith.constant 0 : i32
    return %c0_i32, %c0_i32_0, %c0_i32_1 : i32, i32, i32
  }
  func.func @transform_3(%arg0: i32) -> (i32, i32) {
    %c0_i32 = arith.constant 0 : i32
    %c0_i32_0 = arith.constant 0 : i32
    %c0_i32_1 = arith.constant 0 : i32
    return %c0_i32, %c0_i32_0 : i32, i32
  }
  func.func @transform_4(%arg0: i32) -> (i32, i32) {
    %c0_i32 = arith.constant 0 : i32
    %c0_i32_0 = arith.constant 0 : i32
    %c0_i32_1 = arith.constant 0 : i32
    return %c0_i32, %c0_i32_0 : i32, i32
  }
  func.func @transform_5(%arg0: i32) -> (i32, i32) {
    %c0_i32 = arith.constant 0 : i32
    %c0_i32_0 = arith.constant 0 : i32
    %c0_i32_1 = arith.constant 0 : i32
    return %c0_i32, %c0_i32_0 : i32, i32
  }
  func.func @transform_6(%arg0: i32) -> (i32, i32, i32) {
    %c0_i32 = arith.constant 0 : i32
    %c0_i32_0 = arith.constant 0 : i32
    %c0_i32_1 = arith.constant 0 : i32
    %c0_i32_2 = arith.constant 0 : i32
    return %c0_i32, %c0_i32_0, %c0_i32_1 : i32, i32, i32
  }
  func.func @transform_7(%arg0: i32) -> (i32, i32) {
    %c0_i32 = arith.constant 0 : i32
    %c0_i32_0 = arith.constant 0 : i32
    %c0_i32_1 = arith.constant 0 : i32
    return %c0_i32, %c0_i32_0 : i32, i32
  }
  func.func @transform_8(%arg0: i32) -> (i32, i32) {
    %c0_i32 = arith.constant 0 : i32
    %c0_i32_0 = arith.constant 0 : i32
    %c0_i32_1 = arith.constant 0 : i32
    return %c0_i32, %c0_i32_0 : i32, i32
  }
  func.func @transform_9(%arg0: i32) -> (i32, i32) {
    %c0_i32 = arith.constant 0 : i32
    %c0_i32_0 = arith.constant 0 : i32
    %c0_i32_1 = arith.constant 0 : i32
    return %c0_i32, %c0_i32_0 : i32, i32
  }
  func.func @transform_10(%arg0: i32) -> (i32, i32) {
    %c0_i32 = arith.constant 0 : i32
    %c0_i32_0 = arith.constant 0 : i32
    %c0_i32_1 = arith.constant 0 : i32
    return %c0_i32, %c0_i32_0 : i32, i32
  }
  func.func @transform_11(%arg0: i32) -> (i32, i32) {
    %c0_i32 = arith.constant 0 : i32
    %c0_i32_0 = arith.constant 0 : i32
    %c0_i32_1 = arith.constant 0 : i32
    return %c0_i32, %c0_i32_0 : i32, i32
  }
  func.func @transform_12(%arg0: i32) -> (i32, i32, i32) {
    %c0_i32 = arith.constant 0 : i32
    %c0_i32_0 = arith.constant 0 : i32
    %c0_i32_1 = arith.constant 0 : i32
    return %arg0, %c0_i32, %c0_i32_0 : i32, i32, i32
  }
}

</mosaic_0001>

<llo_original>
// kernel: tpu_custom_call.1
$region0: #{tpu_custom_call.1}
  #allocation0 [shape = 'u32[]', space=smem, size = 0x4, offset = 0x4, fixed_abs, tag = 'smem constant byte address 0x4 - core index']
  #allocation1 [shape = 'u32[144,128]{1,0:T(1,128)}', space=vmem, size = 0x12000, scoped, tag = 'internal scratch']
  #allocation2 [shape = 'f32[1,1]{1,0:T(1,128)S(1)}', space=vmem, size = 0x200, scoped, tag = 'scoped memory for tpu_custom_call.1']
  %s0 = inlined_call_operand.vmem [shape: f32[2,16,16], index: 0, kind: input, shape index: {}]
  %s1 = inlined_call_operand.vmem [shape: f32[2,1,16], index: 1, kind: input, shape index: {}]
  %s2 = inlined_call_operand.vmem [shape: bf16[3,32,16], index: 2, kind: input, shape index: {}]
  %s3 = inlined_call_operand.vmem [shape: f32[32,1], index: 3, kind: input, shape index: {}]
  %s4 = inlined_call_operand.vmem [shape: f32[32,1], index: 4, kind: input, shape index: {}]
  %s5 = inlined_call_operand.vmem [shape: f32[32,1], index: 5, kind: input, shape index: {}]
  %s6 = inlined_call_operand.vmem [shape: bf16[3,32,32], index: 6, kind: input, shape index: {}]
  %s7 = inlined_call_operand.vmem [shape: f32[32,1], index: 7, kind: input, shape index: {}]
  %s8 = inlined_call_operand.vmem [shape: f32[32,1], index: 8, kind: input, shape index: {}]
  %s9 = inlined_call_operand.vmem [shape: f32[32,1], index: 9, kind: input, shape index: {}]
  %s10 = inlined_call_operand.vmem [shape: f32[32,1], index: 10, kind: input, shape index: {}]
  %s11 = inlined_call_operand.<no memory space> [shape: f32[1,1], index: 11, kind: input, shape index: {}]
  %s12 = inlined_call_operand.hbm [shape: f32[2,1,16], index: 12, kind: output, shape index: {}]
  %s13 = sld [smem:[#allocation0]]
  $region81: #{tpu_custom_call.1} parent=0
    _
  %s15 = ssub.s32 1, %s13
  %s16 = scalar_select 0, %s15, %s13
  %v17 = vstv %s11
  %18 = vst [vmem:[#allocation2] sm:$0x1] %v17
  $region1: #{tpu_custom_call.1} parent=0
    #allocation3 [shape = 'u8[1024]{0}', space=vmem, size = 0x400, scoped, tag = 'output window, operand 0']
    #allocation4 [shape = 's32[2]{0}', space=sflag, size = 0x8, scoped, tag = 'scoped memory for tpu_custom_call.1']
    %19 = vsyncpa [#allocation4], 0
    %s20 = scalar_lea.sflag [#allocation4], 1
    %21 = vsyncpa %s20, 0
    loop: start=0, step=1, limit=4
    $region2: #{tpu_custom_call.1} parent=1 // loop_pre_header
      _
    $region3: #{tpu_custom_call.1} parent=1 // loop_header
      %s23 = sphi 0, %s27
      %p24 = scmp.ge.s32.totalorder %s23, 4
      %s33 = sphi 0, %s35
      %s36 = sphi 0, %s33
      %s37 = sphi 0, %s36
      %s53 = sphi 0, %s37
      %s59 = sphi 0, %s61
      %s62 = sphi 0, %s59
      %s63 = sphi 0, %s62
      %s79 = sphi 0, %s63
      %s83 = sphi 0, %s83
      %s85 = sphi 0, %s83
      %s86 = sphi 0, %s85
      %s100 = sphi 0, %s86
      %s104 = sphi 0, %s104
      %s106 = sphi 0, %s104
      %s107 = sphi 0, %s106
      %s121 = sphi 0, %s107
      %s125 = sphi 0, %s125
      %s127 = sphi 0, %s125
      %s128 = sphi 0, %s127
      %s142 = sphi 0, %s128
      %s146 = sphi 0, %s146
      %s148 = sphi 0, %s146
      %s149 = sphi 0, %s148
      %s163 = sphi 0, %s149
      %s167 = sphi 0, %s167
      %s169 = sphi 0, %s167
      %s170 = sphi 0, %s169
      %s184 = sphi 0, %s170
      %s188 = sphi 0, %s188
      %s190 = sphi 0, %s188
      %s191 = sphi 0, %s190
      %s205 = sphi 0, %s191
      %s209 = sphi 0, %s209
      %s211 = sphi 0, %s209
      %s212 = sphi 0, %s211
      %s226 = sphi 0, %s212
      %s230 = sphi 0, %s230
      %s232 = sphi 0, %s230
      %s233 = sphi 0, %s232
      %s247 = sphi 0, %s233
      %s251 = sphi 0, %s251
      %s253 = sphi 0, %s251
      %s254 = sphi 0, %s253
      %s268 = sphi 0, %s254
      %s272 = sphi 0, %s272
      %s274 = sphi 0, %s272
      %s275 = sphi 0, %s274
      %s289 = sphi 0, %s275
      %s295 = sphi 0, %s297
      %s298 = sphi 0, %s295
      %s299 = sphi 0, %s298
      %s315 = sphi 0, %s299
    $region4: #{tpu_custom_call.1} parent=1 // loop_header_branch
      %26 = sbr.rel (%p24) target = $region8
    $region5: #{tpu_custom_call.1} parent=1 // loop_body
      %s28 = ssub.s32 %s23, 1
      %s29 = ssub.s32 %s23, 2
      %s30 = sadd.s32 %s23, 1
      %s31 = ssub.s32 %s23, %s30
      %p32 = scmp.eq.s32.totalorder %s31, 0
      %s34 = sadd.s32 %s33, 1
      %s35 = scalar_select %p32, %s33, %s34
      %p38 = pneg %p32
      %p39 = scmp.eq.s32.totalorder %s23, 1
      %p40 = por %p38, %p39
      %p41 = scmp.ne.s32.totalorder %s33, %s36
      %p42 = scmp.eq.s32.totalorder %s23, 0
      %p43 = por %p41, %p42
      %p44 = scmp.ne.s32.totalorder %s33, %s36
      %p45 = scmp.eq.s32.totalorder %s28, 1
      %p46 = por %p44, %p45
      %p47 = scmp.ne.s32.totalorder %s36, %s37
      %p48 = scmp.eq.s32.totalorder %s28, 0
      %p49 = por %p47, %p48
      %p50 = scmp.ne.s32.totalorder %s36, %s37
      %p51 = scmp.eq.s32.totalorder %s29, 1
      %p52 = por %p50, %p51
      %p54 = scmp.ne.s32.totalorder %s37, %s53
      %p55 = scmp.eq.s32.totalorder %s29, 0
      %p56 = por %p54, %p55
      %s57 = ssub.s32 %s23, %s30
      %p58 = scmp.eq.s32.totalorder %s57, 0
      %s60 = sadd.s32 %s59, 1
      %s61 = scalar_select %p58, %s59, %s60
      %p64 = pneg %p58
      %p65 = scmp.eq.s32.totalorder %s23, 1
      %p66 = por %p64, %p65
      %p67 = scmp.ne.s32.totalorder %s59, %s62
      %p68 = scmp.eq.s32.totalorder %s23, 0
      %p69 = por %p67, %p68
      %p70 = scmp.ne.s32.totalorder %s59, %s62
      %p71 = scmp.eq.s32.totalorder %s28, 1
      %p72 = por %p70, %p71
      %p73 = scmp.ne.s32.totalorder %s62, %s63
      %p74 = scmp.eq.s32.totalorder %s28, 0
      %p75 = por %p73, %p74
      %p76 = scmp.ne.s32.totalorder %s62, %s63
      %p77 = scmp.eq.s32.totalorder %s29, 1
      %p78 = por %p76, %p77
      %p80 = scmp.ne.s32.totalorder %s63, %s79
      %p81 = scmp.eq.s32.totalorder %s29, 0
      %p82 = por %p80, %p81
      %s84 = sadd.s32 %s83, 1
      %p87 = scmp.eq.s32.totalorder %s23, 1
      %p88 = scmp.ne.s32.totalorder %s83, %s85
      %p89 = scmp.eq.s32.totalorder %s23, 0
      %p90 = por %p88, %p89
      %p91 = scmp.ne.s32.totalorder %s83, %s85
      %p92 = scmp.eq.s32.totalorder %s28, 1
      %p93 = por %p91, %p92
      %p94 = scmp.ne.s32.totalorder %s85, %s86
      %p95 = scmp.eq.s32.totalorder %s28, 0
      %p96 = por %p94, %p95
      %p97 = scmp.ne.s32.totalorder %s85, %s86
      %p98 = scmp.eq.s32.totalorder %s29, 1
      %p99 = por %p97, %p98
      %p101 = scmp.ne.s32.totalorder %s86, %s100
      %p102 = scmp.eq.s32.totalorder %s29, 0
      %p103 = por %p101, %p102
      %s105 = sadd.s32 %s104, 1
      %p108 = scmp.eq.s32.totalorder %s23, 1
      %p109 = scmp.ne.s32.totalorder %s104, %s106
      %p110 = scmp.eq.s32.totalorder %s23, 0
      %p111 = por %p109, %p110
      %p112 = scmp.ne.s32.totalorder %s104, %s106
      %p113 = scmp.eq.s32.totalorder %s28, 1
      %p114 = por %p112, %p113
      %p115 = scmp.ne.s32.totalorder %s106, %s107
      %p116 = scmp.eq.s32.totalorder %s28, 0
      %p117 = por %p115, %p116
      %p118 = scmp.ne.s32.totalorder %s106, %s107
      %p119 = scmp.eq.s32.totalorder %s29, 1
      %p120 = por %p118, %p119
      %p122 = scmp.ne.s32.totalorder %s107, %s121
      %p123 = scmp.eq.s32.totalorder %s29, 0
      %p124 = por %p122, %p123
      %s126 = sadd.s32 %s125, 1
      %p129 = scmp.eq.s32.totalorder %s23, 1
      %p130 = scmp.ne.s32.totalorder %s125, %s127
      %p131 = scmp.eq.s32.totalorder %s23, 0
      %p132 = por %p130, %p131
      %p133 = scmp.ne.s32.totalorder %s125, %s127
      %p134 = scmp.eq.s32.totalorder %s28, 1
      %p135 = por %p133, %p134
      %p136 = scmp.ne.s32.totalorder %s127, %s128
      %p137 = scmp.eq.s32.totalorder %s28, 0
      %p138 = por %p136, %p137
      %p139 = scmp.ne.s32.totalorder %s127, %s128
      %p140 = scmp.eq.s32.totalorder %s29, 1
      %p141 = por %p139, %p140
      %p143 = scmp.ne.s32.totalorder %s128, %s142
      %p144 = scmp.eq.s32.totalorder %s29, 0
      %p145 = por %p143, %p144
      %s147 = sadd.s32 %s146, 1
      %p150 = scmp.eq.s32.totalorder %s23, 1
      %p151 = scmp.ne.s32.totalorder %s146, %s148
      %p152 = scmp.eq.s32.totalorder %s23, 0
      %p153 = por %p151, %p152
      %p154 = scmp.ne.s32.totalorder %s146, %s148
      %p155 = scmp.eq.s32.totalorder %s28, 1
      %p156 = por %p154, %p155
      %p157 = scmp.ne.s32.totalorder %s148, %s149
      %p158 = scmp.eq.s32.totalorder %s28, 0
      %p159 = por %p157, %p158
      %p160 = scmp.ne.s32.totalorder %s148, %s149
      %p161 = scmp.eq.s32.totalorder %s29, 1
      %p162 = por %p160, %p161
      %p164 = scmp.ne.s32.totalorder %s149, %s163
      %p165 = scmp.eq.s32.totalorder %s29, 0
      %p166 = por %p164, %p165
      %s168 = sadd.s32 %s167, 1
      %p171 = scmp.eq.s32.totalorder %s23, 1
      %p172 = scmp.ne.s32.totalorder %s167, %s169
      %p173 = scmp.eq.s32.totalorder %s23, 0
      %p174 = por %p172, %p173
      %p175 = scmp.ne.s32.totalorder %s167, %s169
      %p176 = scmp.eq.s32.totalorder %s28, 1
      %p177 = por %p175, %p176
      %p178 = scmp.ne.s32.totalorder %s169, %s170
      %p179 = scmp.eq.s32.totalorder %s28, 0
      %p180 = por %p178, %p179
      %p181 = scmp.ne.s32.totalorder %s169, %s170
      %p182 = scmp.eq.s32.totalorder %s29, 1
      %p183 = por %p181, %p182
      %p185 = scmp.ne.s32.totalorder %s170, %s184
      %p186 = scmp.eq.s32.totalorder %s29, 0
      %p187 = por %p185, %p186
      %s189 = sadd.s32 %s188, 1
      %p192 = scmp.eq.s32.totalorder %s23, 1
      %p193 = scmp.ne.s32.totalorder %s188, %s190
      %p194 = scmp.eq.s32.totalorder %s23, 0
      %p195 = por %p193, %p194
      %p196 = scmp.ne.s32.totalorder %s188, %s190
      %p197 = scmp.eq.s32.totalorder %s28, 1
      %p198 = por %p196, %p197
      %p199 = scmp.ne.s32.totalorder %s190, %s191
      %p200 = scmp.eq.s32.totalorder %s28, 0
      %p201 = por %p199, %p200
      %p202 = scmp.ne.s32.totalorder %s190, %s191
      %p203 = scmp.eq.s32.totalorder %s29, 1
      %p204 = por %p202, %p203
      %p206 = scmp.ne.s32.totalorder %s191, %s205
      %p207 = scmp.eq.s32.totalorder %s29, 0
      %p208 = por %p206, %p207
      %s210 = sadd.s32 %s209, 1
      %p213 = scmp.eq.s32.totalorder %s23, 1
      %p214 = scmp.ne.s32.totalorder %s209, %s211
      %p215 = scmp.eq.s32.totalorder %s23, 0
      %p216 = por %p214, %p215
      %p217 = scmp.ne.s32.totalorder %s209, %s211
      %p218 = scmp.eq.s32.totalorder %s28, 1
      %p219 = por %p217, %p218
      %p220 = scmp.ne.s32.totalorder %s211, %s212
      %p221 = scmp.eq.s32.totalorder %s28, 0
      %p222 = por %p220, %p221
      %p223 = scmp.ne.s32.totalorder %s211, %s212
      %p224 = scmp.eq.s32.totalorder %s29, 1
      %p225 = por %p223, %p224
      %p227 = scmp.ne.s32.totalorder %s212, %s226
      %p228 = scmp.eq.s32.totalorder %s29, 0
      %p229 = por %p227, %p228
      %s231 = sadd.s32 %s230, 1
      %p234 = scmp.eq.s32.totalorder %s23, 1
      %p235 = scmp.ne.s32.totalorder %s230, %s232
      %p236 = scmp.eq.s32.totalorder %s23, 0
      %p237 = por %p235, %p236
      %p238 = scmp.ne.s32.totalorder %s230, %s232
      %p239 = scmp.eq.s32.totalorder %s28, 1
      %p240 = por %p238, %p239
      %p241 = scmp.ne.s32.totalorder %s232, %s233
      %p242 = scmp.eq.s32.totalorder %s28, 0
      %p243 = por %p241, %p242
      %p244 = scmp.ne.s32.totalorder %s232, %s233
      %p245 = scmp.eq.s32.totalorder %s29, 1
      %p246 = por %p244, %p245
      %p248 = scmp.ne.s32.totalorder %s233, %s247
      %p249 = scmp.eq.s32.totalorder %s29, 0
      %p250 = por %p248, %p249
      %s252 = sadd.s32 %s251, 1
      %p255 = scmp.eq.s32.totalorder %s23, 1
      %p256 = scmp.ne.s32.totalorder %s251, %s253
      %p257 = scmp.eq.s32.totalorder %s23, 0
      %p258 = por %p256, %p257
      %p259 = scmp.ne.s32.totalorder %s251, %s253
      %p260 = scmp.eq.s32.totalorder %s28, 1
      %p261 = por %p259, %p260
      %p262 = scmp.ne.s32.totalorder %s253, %s254
      %p263 = scmp.eq.s32.totalorder %s28, 0
      %p264 = por %p262, %p263
      %p265 = scmp.ne.s32.totalorder %s253, %s254
      %p266 = scmp.eq.s32.totalorder %s29, 1
      %p267 = por %p265, %p266
      %p269 = scmp.ne.s32.totalorder %s254, %s268
      %p270 = scmp.eq.s32.totalorder %s29, 0
      %p271 = por %p269, %p270
      %s273 = sadd.s32 %s272, 1
      %p276 = scmp.eq.s32.totalorder %s23, 1
      %p277 = scmp.ne.s32.totalorder %s272, %s274
      %p278 = scmp.eq.s32.totalorder %s23, 0
      %p279 = por %p277, %p278
      %p280 = scmp.ne.s32.totalorder %s272, %s274
      %p281 = scmp.eq.s32.totalorder %s28, 1
      %p282 = por %p280, %p281
      %p283 = scmp.ne.s32.totalorder %s274, %s275
      %p284 = scmp.eq.s32.totalorder %s28, 0
      %p285 = por %p283, %p284
      %p286 = scmp.ne.s32.totalorder %s274, %s275
      %p287 = scmp.eq.s32.totalorder %s29, 1
      %p288 = por %p286, %p287
      %p290 = scmp.ne.s32.totalorder %s275, %s289
      %p291 = scmp.eq.s32.totalorder %s29, 0
      %p292 = por %p290, %p291
      %s293 = ssub.s32 %s23, %s30
      %p294 = scmp.eq.s32.totalorder %s293, 0
      %s296 = sadd.s32 %s295, 1
      %s297 = scalar_select %p294, %s295, %s296
      %p300 = pneg %p294
      %p301 = scmp.eq.s32.totalorder %s23, 1
      %p302 = por %p300, %p301
      %p303 = scmp.ne.s32.totalorder %s295, %s298
      %p304 = scmp.eq.s32.totalorder %s23, 0
      %p305 = por %p303, %p304
      %p306 = scmp.ne.s32.totalorder %s295, %s298
      %p307 = scmp.eq.s32.totalorder %s28, 1
      %p308 = por %p306, %p307
      %p309 = scmp.ne.s32.totalorder %s298, %s299
      %p310 = scmp.eq.s32.totalorder %s28, 0
      %p311 = por %p309, %p310
      %p312 = scmp.ne.s32.totalorder %s298, %s299
      %p313 = scmp.eq.s32.totalorder %s29, 1
      %p314 = por %p312, %p313
      %p316 = scmp.ne.s32.totalorder %s299, %s315
      %p317 = scmp.eq.s32.totalorder %s29, 0
      %p318 = por %p316, %p317
      %p319 = scmp.le.s32.totalorder 1, %s23
      %p320 = scmp.lt.s32.totalorder %s23, 3
      %p321 = pnand %p319, %p320
      %p322 = pneg %p321
      // Predicated region
      $region9: #{tpu_custom_call.1} parent=5 // pred_check
        _
      $region10: #{tpu_custom_call.1} parent=5 // pred_check_branch
        %324 = sbr.rel (%p321) target = $region12
      $region11: #{tpu_custom_call.1} parent=5 // pred_region
        %s325 = ssub.s32 %s23, 1
        // Predicated region
        $region13: #{tpu_custom_call.1} parent=11 // pred_check
          %p326 = pneg %p96
        $region14: #{tpu_custom_call.1} parent=11 // pred_check_branch
          %328 = sbr.rel (%p326) target = $region16
        $region15: #{tpu_custom_call.1} parent=11 // pred_region
          _
        $region16: #{tpu_custom_call.1} parent=11 // pred_fallthru
          _
        // Predicated region
        $region17: #{tpu_custom_call.1} parent=11 // pred_check
          %p329 = pneg %p117
        $region18: #{tpu_custom_call.1} parent=11 // pred_check_branch
          %331 = sbr.rel (%p329) target = $region20
        $region19: #{tpu_custom_call.1} parent=11 // pred_region
          _
        $region20: #{tpu_custom_call.1} parent=11 // pred_fallthru
          _
        // Predicated region
        $region21: #{tpu_custom_call.1} parent=11 // pred_check
          %p332 = pneg %p138
        $region22: #{tpu_custom_call.1} parent=11 // pred_check_branch
          %334 = sbr.rel (%p332) target = $region24
        $region23: #{tpu_custom_call.1} parent=11 // pred_region
          _
        $region24: #{tpu_custom_call.1} parent=11 // pred_fallthru
          _
        // Predicated region
        $region25: #{tpu_custom_call.1} parent=11 // pred_check
          %p335 = pneg %p159
        $region26: #{tpu_custom_call.1} parent=11 // pred_check_branch
          %337 = sbr.rel (%p335) target = $region28
        $region27: #{tpu_custom_call.1} parent=11 // pred_region
          _
        $region28: #{tpu_custom_call.1} parent=11 // pred_fallthru
          _
        // Predicated region
        $region29: #{tpu_custom_call.1} parent=11 // pred_check
          %p338 = pneg %p180
        $region30: #{tpu_custom_call.1} parent=11 // pred_check_branch
          %340 = sbr.rel (%p338) target = $region32
        $region31: #{tpu_custom_call.1} parent=11 // pred_region
          _
        $region32: #{tpu_custom_call.1} parent=11 // pred_fallthru
          _
        // Predicated region
        $region33: #{tpu_custom_call.1} parent=11 // pred_check
          %p341 = pneg %p201
        $region34: #{tpu_custom_call.1} parent=11 // pred_check_branch
          %343 = sbr.rel (%p341) target = $region36
        $region35: #{tpu_custom_call.1} parent=11 // pred_region
          _
        $region36: #{tpu_custom_call.1} parent=11 // pred_fallthru
          _
        // Predicated region
        $region37: #{tpu_custom_call.1} parent=11 // pred_check
          %p344 = pneg %p222
        $region38: #{tpu_custom_call.1} parent=11 // pred_check_branch
          %346 = sbr.rel (%p344) target = $region40
        $region39: #{tpu_custom_call.1} parent=11 // pred_region
          _
        $region40: #{tpu_custom_call.1} parent=11 // pred_fallthru
          _
        // Predicated region
        $region41: #{tpu_custom_call.1} parent=11 // pred_check
          %p347 = pneg %p243
        $region42: #{tpu_custom_call.1} parent=11 // pred_check_branch
          %349 = sbr.rel (%p347) target = $region44
        $region43: #{tpu_custom_call.1} parent=11 // pred_region
          _
        $region44: #{tpu_custom_call.1} parent=11 // pred_fallthru
          _
        // Predicated region
        $region45: #{tpu_custom_call.1} parent=11 // pred_check
          %p350 = pneg %p264
        $region46: #{tpu_custom_call.1} parent=11 // pred_check_branch
          %352 = sbr.rel (%p350) target = $region48
        $region47: #{tpu_custom_call.1} parent=11 // pred_region
          _
        $region48: #{tpu_custom_call.1} parent=11 // pred_fallthru
          _
        // Predicated region
        $region49: #{tpu_custom_call.1} parent=11 // pred_check
          %p353 = pneg %p285
        $region50: #{tpu_custom_call.1} parent=11 // pred_check_branch
          %355 = sbr.rel (%p353) target = $region52
        $region51: #{tpu_custom_call.1} parent=11 // pred_region
          _
        $region52: #{tpu_custom_call.1} parent=11 // pred_fallthru
          _
      $region12: #{tpu_custom_call.1} parent=5 // pred_fallthru
        _
      %p356 = scmp.lt.s32.totalorder %s23, 2
      // Predicated region
      $region53: #{tpu_custom_call.1} parent=5 // pred_check
        %p357 = pneg %p356
      $region54: #{tpu_custom_call.1} parent=5 // pred_check_branch
        %359 = sbr.rel (%p357) target = $region56
      $region55: #{tpu_custom_call.1} parent=5 // pred_region
        // Predicated region
        $region57: #{tpu_custom_call.1} parent=55 // pred_check
          %p360 = pneg %p43
        $region58: #{tpu_custom_call.1} parent=55 // pred_check_branch
          %362 = sbr.rel (%p360) target = $region60
        $region59: #{tpu_custom_call.1} parent=55 // pred_region
          %p363 = scmp.lt.s32.totalorder %s23, 1
          %s364 = scalar_select %p363, %s23, 1
          %s365 = smul.addr %s364, 2
          %s366 = smul.addr %s365, 8
          %s367 = scalar_lea.vmem %s0, %s366
        $region60: #{tpu_custom_call.1} parent=55 // pred_fallthru
          _
        // Predicated region
        $region61: #{tpu_custom_call.1} parent=55 // pred_check
          %p368 = pneg %p69
        $region62: #{tpu_custom_call.1} parent=55 // pred_check_branch
          %370 = sbr.rel (%p368) target = $region64
        $region63: #{tpu_custom_call.1} parent=55 // pred_region
          %p371 = scmp.lt.s32.totalorder %s23, 1
          %s372 = scalar_select %p371, %s23, 1
          %s373 = scalar_lea.vmem %s1, %s372
        $region64: #{tpu_custom_call.1} parent=55 // pred_fallthru
          _
      $region56: #{tpu_custom_call.1} parent=5 // pred_fallthru
        _
      %p374 = scmp.le.s32.totalorder 1, %s23
      %p375 = scmp.lt.s32.totalorder %s23, 3
      %p376 = pnand %p374, %p375
      %p377 = pneg %p376
      // Predicated region
      $region65: #{tpu_custom_call.1} parent=5 // pred_check
        _
      $region66: #{tpu_custom_call.1} parent=5 // pred_check_branch
        %379 = sbr.rel (%p376) target = $region68
      $region67: #{tpu_custom_call.1} parent=5 // pred_region
        %s380 = ssub.s32 %s23, 1
        %p381 = scmp.lt.s32.totalorder %s28, 1
        %s382 = scalar_select %p381, %s28, 1
        %s383 = smul.addr %s382, 2
        %s384 = smul.addr %s383, 8
        %s385 = scalar_lea.vmem %s0, %s384
        %p386 = pneg %p49
        %p387 = pneg %p46
        %p388 = scmp.lt.s32.totalorder %s28, 1
        %s389 = scalar_select %p388, %s28, 1
        %s390 = scalar_lea.vmem %s1, %s389
        %p391 = pneg %p75
        %p392 = pneg %p72
        %p393 = pneg %p96
        %p394 = pneg %p93
        %p395 = pneg %p117
        %p396 = pneg %p114
        %p397 = pneg %p138
        %p398 = pneg %p135
        %p399 = pneg %p159
        %p400 = pneg %p156
        %p401 = pneg %p180
        %p402 = pneg %p177
        %p403 = pneg %p201
        %p404 = pneg %p198
        %p405 = pneg %p222
        %p406 = pneg %p219
        %p407 = pneg %p243
        %p408 = pneg %p240
        %p409 = pneg %p264
        %p410 = pneg %p261
        %p411 = pneg %p285
        %p412 = pneg %p282
        %p413 = pneg %p311
        %p414 = pneg %p308
        %s415 = sand.u32 %s298, 1
        %s416 = scalar_lea.sflag [#allocation4], %s415
        %s417 = sand.u32 %s298, 1
        %s418 = scalar_lea.vmem [#allocation3], %s417
        %p419 = scmp.lt.s32.totalorder %s28, 1
        %s420 = scalar_select %p419, %s28, 1
        %s421 = smul.addr %s420, 2
        %s422 = smul.addr %s421, 8
        %s423 = scalar_lea.vmem %s0, %s422
        %p424 = scmp.lt.s32.totalorder %s28, 1
        %s425 = scalar_select %p424, %s28, 1
        %s426 = scalar_lea.vmem %s1, %s425
        %v428 = vld [vmem:[%s423] sm:$0xff]
        %v429 = vld [vmem:[%s423 + $0x8] sm:$0xff]
        %v430 = vld [vmem:[%s426] sm:$0x1]
        %v431 = vlaneseq
        %v432 = vand.u32 %v431, 127
        %v434 = vlaneseq
        %v435 = vshrl.u32 %v434, 7
        %v436 = vsub.s32 0, %v435
        %v437 = vrot.slane %v430, %v436
        %v439 = vmul.f32 %v428, %v437
        %v440 = vmul.f32 %v429, %v437
        %v441 = vld [vmem:[%s3] sm:$0xff]
        %v442 = vld [vmem:[%s3 + $0x8] sm:$0xff]
        %v443 = vld [vmem:[%s3 + $0x10] sm:$0xff]
        %v444 = vld [vmem:[%s3 + $0x18] sm:$0xff]
        %v445 = vpack.c.bf16 %v440, %v439
        %v446 = vld [vmem:[%s2] sm:$0xf]
        %v447 = vld [vmem:[%s2 + $0x4] sm:$0xf]
        %v448 = vld [vmem:[%s2 + $0x8] sm:$0xf]
        %v449 = vld [vmem:[%s2 + $0xc] sm:$0xf]
        %v454 = vunpack.c.l.b16 %v446
        %v455 = vunpack.c.l.b16 %v447
        %v456 = vunpack.c.l.b16 %v448
        %v457 = vunpack.c.l.b16 %v449
        %v458 = vpack.c.b16 %v455, %v454
        %v459 = vpack.c.b16 %v457, %v456
        %vm460 = vcmask 130048
        %v462 = vsel %vm460, %v458, 0
        %v465 = vsel %vm460, %v459, 0
        %467 = vmatprep.subr.bf16.mxu0 0
        %468 = vmatpush1.bf16.msra.mxu0 0
        %469 = vmatprep.subr.bf16.mxu0 0
        %470 = vmatpush1.bf16.msra.mxu0 0
        %471 = vmatprep.subr.bf16.mxu0 0
        %472 = vmatpush1.bf16.msra.mxu0 0
        %473 = vmatprep.subr.bf16.mxu0 0
        %474 = vmatpush1.bf16.msra.mxu0 0
        %475 = vmatprep.subr.bf16.mxu0 0
        %476 = vmatpush1.bf16.msra.mxu0 0
        %477 = vmatprep.subr.bf16.mxu0 0
        %478 = vmatpush1.bf16.msra.mxu0 0
        %479 = vmatprep.subr.bf16.mxu0 0
        %480 = vmatpush1.bf16.msra.mxu0 0
        %481 = vmatprep.subr.bf16.mxu0 0
        %482 = vmatpush1.bf16.msra.mxu0 %v445
        %483 = vmatprep.subr.bf16.mxu0 0
        %484 = vmatpush2.bf16.msra.mxu0 0
        %485 = vmatprep.subr.bf16.mxu0 0
        %486 = vmatpush2.bf16.msra.mxu0 0
        %487 = vmatprep.subr.bf16.mxu0 0
        %488 = vmatpush2.bf16.msra.mxu0 0
        %489 = vmatprep.subr.bf16.mxu0 0
        %490 = vmatpush2.bf16.msra.mxu0 0
        %491 = vmatprep.subr.bf16.mxu0 0
        %492 = vmatpush2.bf16.msra.mxu0 0
        %493 = vmatprep.subr.bf16.mxu0 0
        %494 = vmatpush2.bf16.msra.mxu0 0
        %495 = vmatprep.subr.bf16.mxu0 0
        %496 = vmatpush2.bf16.msra.mxu0 0
        %497 = vmatprep.subr.bf16.mxu0 0
        %498 = vmatpush2.bf16.msra.mxu0 0
        %499 = vmatprep.mubr.bf16.mxu0 0
        %500 = vmatmul.mubr.bf16.gmra.mxu0 %v462
        %v501 = vpop.f32.mrf.mxu0
        %v502 = vadd.f32 0.0, %v501
        %v503 = vpop.f32.mrf.mxu0
        %v504 = vpop.f32.mrf.mxu0
        %v505 = vadd.f32 0.0, %v504
        %v506 = vpop.f32.mrf.mxu0
        %507 = vmatprep.mubr.bf16.mxu0 0
        %508 = vmatmul.mubr.bf16.gmra.mxu0 %v465
        %v509 = vpop.f32.mrf.mxu0
        %v510 = vadd.f32 0.0, %v509
        %v511 = vpop.f32.mrf.mxu0
        %v512 = vpop.f32.mrf.mxu0
        %v513 = vadd.f32 0.0, %v512
        %v514 = vpop.f32.mrf.mxu0
        %515 = vdwg.mxu0
        %vm516 = vcmask 1047680
        %517 = vrot.lane.b32.xlu0 %v502, 16
        %v518 = vpop.permute.xlu0 %517
        %v519 = vsel %vm516, %v518, %v502
        %520 = vrot.lane.b32.xlu0 %v505, 16
        %v521 = vpop.permute.xlu0 %520
        %v522 = vsel %vm516, %v521, %v505
        %523 = vrot.lane.b32.xlu0 %v510, 16
        %v524 = vpop.permute.xlu0 %523
        %v525 = vsel %vm516, %v524, %v510
        %526 = vrot.lane.b32.xlu0 %v513, 16
        %v527 = vpop.permute.xlu0 %526
        %v528 = vsel %vm516, %v527, %v513
        %529 = vrot.lane.b32.xlu0 %v519, 16
        %v530 = vpop.permute.xlu0 %529
        %531 = vrot.lane.b32.xlu0 %v522, 16
        %v532 = vpop.permute.xlu0 %531
        %533 = vrot.lane.b32.xlu0 %v525, 16
        %v534 = vpop.permute.xlu0 %533
        %535 = vrot.lane.b32.xlu0 %v528, 16
        %v536 = vpop.permute.xlu0 %535
        %v537 = vsel %vm516, %v530, %v502
        %v538 = vsel %vm516, %v532, %v505
        %v539 = vsel %vm516, %v534, %v510
        %v540 = vsel %vm516, %v536, %v513
        %vm541 = vcmp.lt.s32.totalorder %v432, 1
        %v542 = vsel %vm541, 1, 0
        %vm543 = vcmp.eq.s32.totalorder %v542, 1
        %548 = vrot.lane.b32.xlu0 %v537, 113
        %v549 = vpop.permute.xlu0 %548
        %550 = vrot.lane.b32.xlu0 %v538, 113
        %v551 = vpop.permute.xlu0 %550
        %552 = vrot.lane.b32.xlu0 %v539, 113
        %v553 = vpop.permute.xlu0 %552
        %554 = vrot.lane.b32.xlu0 %v540, 113
        %v555 = vpop.permute.xlu0 %554
        %v560 = vsel %vm543, 0.0, %v549
        %v561 = vsel %vm543, 0.0, %v551
        %v562 = vsel %vm543, 0.0, %v553
        %v563 = vsel %vm543, 0.0, %v555
        %v564 = vadd.f32 %v560, 0.0
        %v565 = vadd.f32 %v561, 0.0
        %v566 = vadd.f32 %v562, 0.0
        %v567 = vadd.f32 %v563, 0.0
        %s568 = scalar_lea.vmem %s2, 16
        %v569 = vld [vmem:[%s568] sm:$0xf]
        %v570 = vld [vmem:[%s568 + $0x4] sm:$0xf]
        %v571 = vld [vmem:[%s568 + $0x8] sm:$0xf]
        %v572 = vld [vmem:[%s568 + $0xc] sm:$0xf]
        %v577 = vunpack.c.l.b16 %v569
        %v578 = vunpack.c.l.b16 %v570
        %v579 = vunpack.c.l.b16 %v571
        %v580 = vunpack.c.l.b16 %v572
        %v581 = vpack.c.b16 %v578, %v577
        %v582 = vpack.c.b16 %v580, %v579
        %v584 = vsel %vm460, %v581, 0
        %v587 = vsel %vm460, %v582, 0
        %589 = vmatprep.subr.bf16.mxu0 0
        %590 = vmatpush1.bf16.msra.mxu0 0
        %591 = vmatprep.subr.bf16.mxu0 0
        %592 = vmatpush1.bf16.msra.mxu0 0
        %593 = vmatprep.subr.bf16.mxu0 0
        %594 = vmatpush1.bf16.msra.mxu0 0
        %595 = vmatprep.subr.bf16.mxu0 0
        %596 = vmatpush1.bf16.msra.mxu0 0
        %597 = vmatprep.subr.bf16.mxu0 0
        %598 = vmatpush1.bf16.msra.mxu0 0
        %599 = vmatprep.subr.bf16.mxu0 0
        %600 = vmatpush1.bf16.msra.mxu0 0
        %601 = vmatprep.subr.bf16.mxu0 0
        %602 = vmatpush1.bf16.msra.mxu0 0
        %603 = vmatprep.subr.bf16.mxu0 0
        %604 = vmatpush1.bf16.msra.mxu0 %v445
        %605 = vmatprep.subr.bf16.mxu0 0
        %606 = vmatpush2.bf16.msra.mxu0 0
        %607 = vmatprep.subr.bf16.mxu0 0
        %608 = vmatpush2.bf16.msra.mxu0 0
        %609 = vmatprep.subr.bf16.mxu0 0
        %610 = vmatpush2.bf16.msra.mxu0 0
        %611 = vmatprep.subr.bf16.mxu0 0
        %612 = vmatpush2.bf16.msra.mxu0 0
        %613 = vmatprep.subr.bf16.mxu0 0
        %614 = vmatpush2.bf16.msra.mxu0 0
        %615 = vmatprep.subr.bf16.mxu0 0
        %616 = vmatpush2.bf16.msra.mxu0 0
        %617 = vmatprep.subr.bf16.mxu0 0
        %618 = vmatpush2.bf16.msra.mxu0 0
        %619 = vmatprep.subr.bf16.mxu0 0
        %620 = vmatpush2.bf16.msra.mxu0 0
        %621 = vmatprep.mubr.bf16.mxu0 0
        %622 = vmatmul.mubr.bf16.gmra.mxu0 %v584
        %v623 = vpop.f32.mrf.mxu0
        %v624 = vadd.f32 0.0, %v623
        %v625 = vpop.f32.mrf.mxu0
        %v626 = vpop.f32.mrf.mxu0
        %v627 = vadd.f32 0.0, %v626
        %v628 = vpop.f32.mrf.mxu0
        %629 = vmatprep.mubr.bf16.mxu0 0
        %630 = vmatmul.mubr.bf16.gmra.mxu0 %v587
        %v631 = vpop.f32.mrf.mxu0
        %v632 = vadd.f32 0.0, %v631
        %v633 = vpop.f32.mrf.mxu0
        %v634 = vpop.f32.mrf.mxu0
        %v635 = vadd.f32 0.0, %v634
        %v636 = vpop.f32.mrf.mxu0
        %637 = vdwg.mxu0
        %v638 = vadd.f32 %v564, %v624
        %v639 = vadd.f32 %v565, %v627
        %v640 = vadd.f32 %v566, %v632
        %v641 = vadd.f32 %v567, %v635
        %s642 = scalar_lea.vmem %s2, 32
        %v643 = vld [vmem:[%s642] sm:$0xf]
        %v644 = vld [vmem:[%s642 + $0x4] sm:$0xf]
        %v645 = vld [vmem:[%s642 + $0x8] sm:$0xf]
        %v646 = vld [vmem:[%s642 + $0xc] sm:$0xf]
        %v651 = vunpack.c.l.b16 %v643
        %v652 = vunpack.c.l.b16 %v644
        %v653 = vunpack.c.l.b16 %v645
        %v654 = vunpack.c.l.b16 %v646
        %v655 = vpack.c.b16 %v652, %v651
        %v656 = vpack.c.b16 %v654, %v653
        %v658 = vsel %vm460, %v655, 0
        %v661 = vsel %vm460, %v656, 0
        %663 = vmatprep.subr.bf16.mxu0 0
        %664 = vmatpush1.bf16.msra.mxu0 0
        %665 = vmatprep.subr.bf16.mxu0 0
        %666 = vmatpush1.bf16.msra.mxu0 0
        %667 = vmatprep.subr.bf16.mxu0 0
        %668 = vmatpush1.bf16.msra.mxu0 0
        %669 = vmatprep.subr.bf16.mxu0 0
        %670 = vmatpush1.bf16.msra.mxu0 0
        %671 = vmatprep.subr.bf16.mxu0 0
        %672 = vmatpush1.bf16.msra.mxu0 0
        %673 = vmatprep.subr.bf16.mxu0 0
        %674 = vmatpush1.bf16.msra.mxu0 0
        %675 = vmatprep.subr.bf16.mxu0 0
        %676 = vmatpush1.bf16.msra.mxu0 0
        %677 = vmatprep.subr.bf16.mxu0 0
        %678 = vmatpush1.bf16.msra.mxu0 %v445
        %679 = vmatprep.subr.bf16.mxu0 0
        %680 = vmatpush2.bf16.msra.mxu0 0
        %681 = vmatprep.subr.bf16.mxu0 0
        %682 = vmatpush2.bf16.msra.mxu0 0
        %683 = vmatprep.subr.bf16.mxu0 0
        %684 = vmatpush2.bf16.msra.mxu0 0
        %685 = vmatprep.subr.bf16.mxu0 0
        %686 = vmatpush2.bf16.msra.mxu0 0
        %687 = vmatprep.subr.bf16.mxu0 0
        %688 = vmatpush2.bf16.msra.mxu0 0
        %689 = vmatprep.subr.bf16.mxu0 0
        %690 = vmatpush2.bf16.msra.mxu0 0
        %691 = vmatprep.subr.bf16.mxu0 0
        %692 = vmatpush2.bf16.msra.mxu0 0
        %693 = vmatprep.subr.bf16.mxu0 0
        %694 = vmatpush2.bf16.msra.mxu0 0
        %695 = vmatprep.mubr.bf16.mxu0 0
        %696 = vmatmul.mubr.bf16.gmra.mxu0 %v658
        %v697 = vpop.f32.mrf.mxu0
        %v698 = vadd.f32 0.0, %v697
        %v699 = vpop.f32.mrf.mxu0
        %v700 = vpop.f32.mrf.mxu0
        %v701 = vadd.f32 0.0, %v700
        %v702 = vpop.f32.mrf.mxu0
        %703 = vmatprep.mubr.bf16.mxu0 0
        %704 = vmatmul.mubr.bf16.gmra.mxu0 %v661
        %v705 = vpop.f32.mrf.mxu0
        %v706 = vadd.f32 0.0, %v705
        %v707 = vpop.f32.mrf.mxu0
        %v708 = vpop.f32.mrf.mxu0
        %v709 = vadd.f32 0.0, %v708
        %v710 = vpop.f32.mrf.mxu0
        %711 = vdwg.mxu0
        %712 = vrot.lane.b32.xlu0 %v698, 16
        %v713 = vpop.permute.xlu0 %712
        %v714 = vsel %vm516, %v713, %v698
        %715 = vrot.lane.b32.xlu0 %v701, 16
        %v716 = vpop.permute.xlu0 %715
        %v717 = vsel %vm516, %v716, %v701
        %718 = vrot.lane.b32.xlu0 %v706, 16
        %v719 = vpop.permute.xlu0 %718
        %v720 = vsel %vm516, %v719, %v706
        %721 = vrot.lane.b32.xlu0 %v709, 16
        %v722 = vpop.permute.xlu0 %721
        %v723 = vsel %vm516, %v722, %v709
        %724 = vrot.lane.b32.xlu0 %v714, 16
        %v725 = vpop.permute.xlu0 %724
        %726 = vrot.lane.b32.xlu0 %v717, 16
        %v727 = vpop.permute.xlu0 %726
        %728 = vrot.lane.b32.xlu0 %v720, 16
        %v729 = vpop.permute.xlu0 %728
        %730 = vrot.lane.b32.xlu0 %v723, 16
        %v731 = vpop.permute.xlu0 %730
        %v732 = vsel %vm516, %v725, %v698
        %v733 = vsel %vm516, %v727, %v701
        %v734 = vsel %vm516, %v729, %v706
        %v735 = vsel %vm516, %v731, %v709
        %vm736 = vcmp.ge.s32.totalorder %v432, 15
        %v737 = vsel %vm736, 1, 0
        %vm738 = vcmp.eq.s32.totalorder %v737, 1
        %743 = vrot.lane.b32.xlu0 %v732, 127
        %v744 = vpop.permute.xlu0 %743
        %745 = vrot.lane.b32.xlu0 %v733, 127
        %v746 = vpop.permute.xlu0 %745
        %747 = vrot.lane.b32.xlu0 %v734, 127
        %v748 = vpop.permute.xlu0 %747
        %749 = vrot.lane.b32.xlu0 %v735, 127
        %v750 = vpop.permute.xlu0 %749
        %v755 = vsel %vm738, 0.0, %v744
        %v756 = vsel %vm738, 0.0, %v746
        %v757 = vsel %vm738, 0.0, %v748
        %v758 = vsel %vm738, 0.0, %v750
        %v759 = vadd.f32 %v638, %v755
        %v760 = vadd.f32 %v639, %v756
        %v761 = vadd.f32 %v640, %v757
        %v762 = vadd.f32 %v641, %v758
        %764 = vset.pattern.permute.xlu0 0
        %765 = vperm.xlu0 %764, %v441
        %v766 = vpop.permute.xlu0 %765
        %769 = vset.pattern.permute.xlu0 0
        %770 = vperm.xlu0 %769, %v442
        %v771 = vpop.permute.xlu0 %770
        %774 = vset.pattern.permute.xlu0 0
        %775 = vperm.xlu0 %774, %v443
        %v776 = vpop.permute.xlu0 %775
        %779 = vset.pattern.permute.xlu0 0
        %780 = vperm.xlu0 %779, %v444
        %v781 = vpop.permute.xlu0 %780
        %v783 = vadd.f32 %v759, %v766
        %v784 = vadd.f32 %v760, %v771
        %v785 = vadd.f32 %v761, %v776
        %v786 = vadd.f32 %v762, %v781
        %v787 = vmax.f32 %v783, 0.0
        %v788 = vmax.f32 %v784, 0.0
        %v789 = vmax.f32 %v785, 0.0
        %v790 = vmax.f32 %v786, 0.0
        %v791 = vld [vmem:[%s4] sm:$0xff]
        %v792 = vld [vmem:[%s4 + $0x8] sm:$0xff]
        %v793 = vld [vmem:[%s4 + $0x10] sm:$0xff]
        %v794 = vld [vmem:[%s4 + $0x18] sm:$0xff]
        %v795 = vld [vmem:[%s5] sm:$0xff]
        %v796 = vld [vmem:[%s5 + $0x8] sm:$0xff]
        %v797 = vld [vmem:[%s5 + $0x10] sm:$0xff]
        %v798 = vld [vmem:[%s5 + $0x18] sm:$0xff]
        %v799 = vsel %vm460, %v787, 0.0
        %v800 = vsel %vm460, %v788, 0.0
        %v801 = vadd.f32 %v799, %v800
        %v802 = vsel %vm460, %v789, 0.0
        %v803 = vadd.f32 %v801, %v802
        %v804 = vsel %vm460, %v790, 0.0
        %v805 = vadd.f32 %v803, %v804
        %v806 = vrot.slane %v805, 4
        %v807 = vadd.f32 %v805, %v806
        %v808 = vrot.slane %v807, 2
        %v809 = vadd.f32 %v807, %v808
        %v810 = vrot.slane %v809, 1
        %v811 = vadd.f32 %v809, %v810
        %v812 = vrcp.pop 32.0
        %v813 = vmul.f32 %v811, %v812
        %v814 = vsub.f32 %v787, %v813
        %v815 = vsub.f32 %v788, %v813
        %v816 = vsub.f32 %v789, %v813
        %v817 = vsub.f32 %v790, %v813
        %v818 = vmul.f32 %v814, %v814
        %v819 = vmul.f32 %v815, %v815
        %v820 = vmul.f32 %v816, %v816
        %v821 = vmul.f32 %v817, %v817
        %v822 = vsel %vm460, %v818, 0.0
        %v823 = vsel %vm460, %v819, 0.0
        %v824 = vadd.f32 %v822, %v823
        %v825 = vsel %vm460, %v820, 0.0
        %v826 = vadd.f32 %v824, %v825
        %v827 = vsel %vm460, %v821, 0.0
        %v828 = vadd.f32 %v826, %v827
        %v829 = vrot.slane %v828, 4
        %v830 = vadd.f32 %v828, %v829
        %v831 = vrot.slane %v830, 2
        %v832 = vadd.f32 %v830, %v831
        %v833 = vrot.slane %v832, 1
        %v834 = vadd.f32 %v832, %v833
        %v835 = vmul.f32 %v834, %v812
        %v836 = vadd.f32 %v835, 1e-05
        %v837 = vrsqrt.pop %v836
        %v838 = vmul.f32 %v814, %v837
        %v839 = vmul.f32 %v815, %v837
        %v840 = vmul.f32 %v816, %v837
        %v841 = vmul.f32 %v817, %v837
        %843 = vset.pattern.permute.xlu0 0
        %844 = vperm.xlu0 %843, %v791
        %v845 = vpop.permute.xlu0 %844
        %848 = vset.pattern.permute.xlu0 0
        %849 = vperm.xlu0 %848, %v792
        %v850 = vpop.permute.xlu0 %849
        %853 = vset.pattern.permute.xlu0 0
        %854 = vperm.xlu0 %853, %v793
        %v855 = vpop.permute.xlu0 %854
        %858 = vset.pattern.permute.xlu0 0
        %859 = vperm.xlu0 %858, %v794
        %v860 = vpop.permute.xlu0 %859
        %v862 = vmul.f32 %v838, %v845
        %v863 = vmul.f32 %v839, %v850
        %v864 = vmul.f32 %v840, %v855
        %v865 = vmul.f32 %v841, %v860
        %867 = vset.pattern.permute.xlu0 0
        %868 = vperm.xlu0 %867, %v795
        %v869 = vpop.permute.xlu0 %868
        %872 = vset.pattern.permute.xlu0 0
        %873 = vperm.xlu0 %872, %v796
        %v874 = vpop.permute.xlu0 %873
        %877 = vset.pattern.permute.xlu0 0
        %878 = vperm.xlu0 %877, %v797
        %v879 = vpop.permute.xlu0 %878
        %882 = vset.pattern.permute.xlu0 0
        %883 = vperm.xlu0 %882, %v798
        %v884 = vpop.permute.xlu0 %883
        %v886 = vadd.f32 %v862, %v869
        %v887 = vadd.f32 %v863, %v874
        %v888 = vadd.f32 %v864, %v879
        %v889 = vadd.f32 %v865, %v884
        %v890 = vmul.f32 %v886, %v437
        %v891 = vmul.f32 %v887, %v437
        %v892 = vmul.f32 %v888, %v437
        %v893 = vmul.f32 %v889, %v437
        %v894 = vld [vmem:[%s7] sm:$0xff]
        %v895 = vld [vmem:[%s7 + $0x8] sm:$0xff]
        %v896 = vld [vmem:[%s7 + $0x10] sm:$0xff]
        %v897 = vld [vmem:[%s7 + $0x18] sm:$0xff]
        %v898 = vpack.c.bf16 %v891, %v890
        %v899 = vpack.c.bf16 %v893, %v892
        %v900 = vld [vmem:[%s6] sm:$0xf]
        %v901 = vld [vmem:[%s6 + $0x4] sm:$0xf]
        %v902 = vld [vmem:[%s6 + $0x8] sm:$0xf]
        %v903 = vld [vmem:[%s6 + $0xc] sm:$0xf]
        %v908 = vunpack.c.l.b16 %v900
        %v909 = vunpack.c.l.b16 %v901
        %v910 = vunpack.c.l.b16 %v902
        %v911 = vunpack.c.l.b16 %v903
        %v912 = vpack.c.b16 %v909, %v908
        %v913 = vpack.c.b16 %v911, %v910
        %vm914 = vcmask 261120
        %v916 = vsel %vm914, %v912, 0
        %v919 = vsel %vm914, %v913, 0
        %921 = vmatprep.subr.bf16.mxu0 0
        %922 = vmatpush1.bf16.msra.mxu0 0
        %923 = vmatprep.subr.bf16.mxu0 0
        %924 = vmatpush1.bf16.msra.mxu0 0
        %925 = vmatprep.subr.bf16.mxu0 0
        %926 = vmatpush1.bf16.msra.mxu0 0
        %927 = vmatprep.subr.bf16.mxu0 0
        %928 = vmatpush1.bf16.msra.mxu0 0
        %929 = vmatprep.subr.bf16.mxu0 0
        %930 = vmatpush1.bf16.msra.mxu0 0
        %931 = vmatprep.subr.bf16.mxu0 0
        %932 = vmatpush1.bf16.msra.mxu0 0
        %933 = vmatprep.subr.bf16.mxu0 0
        %934 = vmatpush1.bf16.msra.mxu0 %v899
        %935 = vmatprep.subr.bf16.mxu0 0
        %936 = vmatpush1.bf16.msra.mxu0 %v898
        %937 = vmatprep.subr.bf16.mxu0 0
        %938 = vmatpush2.bf16.msra.mxu0 0
        %939 = vmatprep.subr.bf16.mxu0 0
        %940 = vmatpush2.bf16.msra.mxu0 0
        %941 = vmatprep.subr.bf16.mxu0 0
        %942 = vmatpush2.bf16.msra.mxu0 0
        %943 = vmatprep.subr.bf16.mxu0 0
        %944 = vmatpush2.bf16.msra.mxu0 0
        %945 = vmatprep.subr.bf16.mxu0 0
        %946 = vmatpush2.bf16.msra.mxu0 0
        %947 = vmatprep.subr.bf16.mxu0 0
        %948 = vmatpush2.bf16.msra.mxu0 0
        %949 = vmatprep.subr.bf16.mxu0 0
        %950 = vmatpush2.bf16.msra.mxu0 0
        %951 = vmatprep.subr.bf16.mxu0 0
        %952 = vmatpush2.bf16.msra.mxu0 0
        %953 = vmatprep.mubr.bf16.mxu0 0
        %954 = vmatmul.mubr.bf16.gmra.mxu0 %v916
        %v955 = vpop.f32.mrf.mxu0
        %v956 = vadd.f32 0.0, %v955
        %v957 = vpop.f32.mrf.mxu0
        %v958 = vpop.f32.mrf.mxu0
        %v959 = vadd.f32 0.0, %v958
        %v960 = vpop.f32.mrf.mxu0
        %961 = vmatprep.mubr.bf16.mxu0 0
        %962 = vmatmul.mubr.bf16.gmra.mxu0 %v919
        %v963 = vpop.f32.mrf.mxu0
        %v964 = vadd.f32 0.0, %v963
        %v965 = vpop.f32.mrf.mxu0
        %v966 = vpop.f32.mrf.mxu0
        %v967 = vadd.f32 0.0, %v966
        %v968 = vpop.f32.mrf.mxu0
        %969 = vdwg.mxu0
        %970 = vrot.lane.b32.xlu0 %v956, 16
        %v971 = vpop.permute.xlu0 %970
        %v972 = vsel %vm516, %v971, %v956
        %973 = vrot.lane.b32.xlu0 %v959, 16
        %v974 = vpop.permute.xlu0 %973
        %v975 = vsel %vm516, %v974, %v959
        %976 = vrot.lane.b32.xlu0 %v964, 16
        %v977 = vpop.permute.xlu0 %976
        %v978 = vsel %vm516, %v977, %v964
        %979 = vrot.lane.b32.xlu0 %v967, 16
        %v980 = vpop.permute.xlu0 %979
        %v981 = vsel %vm516, %v980, %v967
        %982 = vrot.lane.b32.xlu0 %v972, 16
        %v983 = vpop.permute.xlu0 %982
        %984 = vrot.lane.b32.xlu0 %v975, 16
        %v985 = vpop.permute.xlu0 %984
        %986 = vrot.lane.b32.xlu0 %v978, 16
        %v987 = vpop.permute.xlu0 %986
        %988 = vrot.lane.b32.xlu0 %v981, 16
        %v989 = vpop.permute.xlu0 %988
        %v990 = vsel %vm516, %v983, %v956
        %v991 = vsel %vm516, %v985, %v959
        %v992 = vsel %vm516, %v987, %v964
        %v993 = vsel %vm516, %v989, %v967
        %998 = vrot.lane.b32.xlu0 %v990, 113
        %v999 = vpop.permute.xlu0 %998
        %1000 = vrot.lane.b32.xlu0 %v991, 113
        %v1001 = vpop.permute.xlu0 %1000
        %1002 = vrot.lane.b32.xlu0 %v992, 113
        %v1003 = vpop.permute.xlu0 %1002
        %1004 = vrot.lane.b32.xlu0 %v993, 113
        %v1005 = vpop.permute.xlu0 %1004
        %v1010 = vsel %vm543, 0.0, %v999
        %v1011 = vsel %vm543, 0.0, %v1001
        %v1012 = vsel %vm543, 0.0, %v1003
        %v1013 = vsel %vm543, 0.0, %v1005
        %v1014 = vadd.f32 %v1010, 0.0
        %v1015 = vadd.f32 %v1011, 0.0
        %v1016 = vadd.f32 %v1012, 0.0
        %v1017 = vadd.f32 %v1013, 0.0
        %s1018 = scalar_lea.vmem %s6, 16
        %v1019 = vld [vmem:[%s1018] sm:$0xf]
        %v1020 = vld [vmem:[%s1018 + $0x4] sm:$0xf]
        %v1021 = vld [vmem:[%s1018 + $0x8] sm:$0xf]
        %v1022 = vld [vmem:[%s1018 + $0xc] sm:$0xf]
        %v1027 = vunpack.c.l.b16 %v1019
        %v1028 = vunpack.c.l.b16 %v1020
        %v1029 = vunpack.c.l.b16 %v1021
        %v1030 = vunpack.c.l.b16 %v1022
        %v1031 = vpack.c.b16 %v1028, %v1027
        %v1032 = vpack.c.b16 %v1030, %v1029
        %v1034 = vsel %vm914, %v1031, 0
        %v1037 = vsel %vm914, %v1032, 0
        %1039 = vmatprep.subr.bf16.mxu0 0
        %1040 = vmatpush1.bf16.msra.mxu0 0
        %1041 = vmatprep.subr.bf16.mxu0 0
        %1042 = vmatpush1.bf16.msra.mxu0 0
        %1043 = vmatprep.subr.bf16.mxu0 0
        %1044 = vmatpush1.bf16.msra.mxu0 0
        %1045 = vmatprep.subr.bf16.mxu0 0
        %1046 = vmatpush1.bf16.msra.mxu0 0
        %1047 = vmatprep.subr.bf16.mxu0 0
        %1048 = vmatpush1.bf16.msra.mxu0 0
        %1049 = vmatprep.subr.bf16.mxu0 0
        %1050 = vmatpush1.bf16.msra.mxu0 0
        %1051 = vmatprep.subr.bf16.mxu0 0
        %1052 = vmatpush1.bf16.msra.mxu0 %v899
        %1053 = vmatprep.subr.bf16.mxu0 0
        %1054 = vmatpush1.bf16.msra.mxu0 %v898
        %1055 = vmatprep.subr.bf16.mxu0 0
        %1056 = vmatpush2.bf16.msra.mxu0 0
        %1057 = vmatprep.subr.bf16.mxu0 0
        %1058 = vmatpush2.bf16.msra.mxu0 0
        %1059 = vmatprep.subr.bf16.mxu0 0
        %1060 = vmatpush2.bf16.msra.mxu0 0
        %1061 = vmatprep.subr.bf16.mxu0 0
        %1062 = vmatpush2.bf16.msra.mxu0 0
        %1063 = vmatprep.subr.bf16.mxu0 0
        %1064 = vmatpush2.bf16.msra.mxu0 0
        %1065 = vmatprep.subr.bf16.mxu0 0
        %1066 = vmatpush2.bf16.msra.mxu0 0
        %1067 = vmatprep.subr.bf16.mxu0 0
        %1068 = vmatpush2.bf16.msra.mxu0 0
        %1069 = vmatprep.subr.bf16.mxu0 0
        %1070 = vmatpush2.bf16.msra.mxu0 0
        %1071 = vmatprep.mubr.bf16.mxu0 0
        %1072 = vmatmul.mubr.bf16.gmra.mxu0 %v1034
        %v1073 = vpop.f32.mrf.mxu0
        %v1074 = vadd.f32 0.0, %v1073
        %v1075 = vpop.f32.mrf.mxu0
        %v1076 = vpop.f32.mrf.mxu0
        %v1077 = vadd.f32 0.0, %v1076
        %v1078 = vpop.f32.mrf.mxu0
        %1079 = vmatprep.mubr.bf16.mxu0 0
        %1080 = vmatmul.mubr.bf16.gmra.mxu0 %v1037
        %v1081 = vpop.f32.mrf.mxu0
        %v1082 = vadd.f32 0.0, %v1081
        %v1083 = vpop.f32.mrf.mxu0
        %v1084 = vpop.f32.mrf.mxu0
        %v1085 = vadd.f32 0.0, %v1084
        %v1086 = vpop.f32.mrf.mxu0
        %1087 = vdwg.mxu0
        %v1088 = vadd.f32 %v1014, %v1074
        %v1089 = vadd.f32 %v1015, %v1077
        %v1090 = vadd.f32 %v1016, %v1082
        %v1091 = vadd.f32 %v1017, %v1085
        %s1092 = scalar_lea.vmem %s6, 32
        %v1093 = vld [vmem:[%s1092] sm:$0xf]
        %v1094 = vld [vmem:[%s1092 + $0x4] sm:$0xf]
        %v1095 = vld [vmem:[%s1092 + $0x8] sm:$0xf]
        %v1096 = vld [vmem:[%s1092 + $0xc] sm:$0xf]
        %v1101 = vunpack.c.l.b16 %v1093
        %v1102 = vunpack.c.l.b16 %v1094
        %v1103 = vunpack.c.l.b16 %v1095
        %v1104 = vunpack.c.l.b16 %v1096
        %v1105 = vpack.c.b16 %v1102, %v1101
        %v1106 = vpack.c.b16 %v1104, %v1103
        %v1108 = vsel %vm914, %v1105, 0
        %v1111 = vsel %vm914, %v1106, 0
        %1113 = vmatprep.subr.bf16.mxu0 0
        %1114 = vmatpush1.bf16.msra.mxu0 0
        %1115 = vmatprep.subr.bf16.mxu0 0
        %1116 = vmatpush1.bf16.msra.mxu0 0
        %1117 = vmatprep.subr.bf16.mxu0 0
        %1118 = vmatpush1.bf16.msra.mxu0 0
        %1119 = vmatprep.subr.bf16.mxu0 0
        %1120 = vmatpush1.bf16.msra.mxu0 0
        %1121 = vmatprep.subr.bf16.mxu0 0
        %1122 = vmatpush1.bf16.msra.mxu0 0
        %1123 = vmatprep.subr.bf16.mxu0 0
        %1124 = vmatpush1.bf16.msra.mxu0 0
        %1125 = vmatprep.subr.bf16.mxu0 0
        %1126 = vmatpush1.bf16.msra.mxu0 %v899
        %1127 = vmatprep.subr.bf16.mxu0 0
        %1128 = vmatpush1.bf16.msra.mxu0 %v898
        %1129 = vmatprep.subr.bf16.mxu0 0
        %1130 = vmatpush2.bf16.msra.mxu0 0
        %1131 = vmatprep.subr.bf16.mxu0 0
        %1132 = vmatpush2.bf16.msra.mxu0 0
        %1133 = vmatprep.subr.bf16.mxu0 0
        %1134 = vmatpush2.bf16.msra.mxu0 0
        %1135 = vmatprep.subr.bf16.mxu0 0
        %1136 = vmatpush2.bf16.msra.mxu0 0
        %1137 = vmatprep.subr.bf16.mxu0 0
        %1138 = vmatpush2.bf16.msra.mxu0 0
        %1139 = vmatprep.subr.bf16.mxu0 0
        %1140 = vmatpush2.bf16.msra.mxu0 0
        %1141 = vmatprep.subr.bf16.mxu0 0
        %1142 = vmatpush2.bf16.msra.mxu0 0
        %1143 = vmatprep.subr.bf16.mxu0 0
        %1144 = vmatpush2.bf16.msra.mxu0 0
        %1145 = vmatprep.mubr.bf16.mxu0 0
        %1146 = vmatmul.mubr.bf16.gmra.mxu0 %v1108
        %v1147 = vpop.f32.mrf.mxu0
        %v1148 = vadd.f32 0.0, %v1147
        %v1149 = vpop.f32.mrf.mxu0
        %v1150 = vpop.f32.mrf.mxu0
        %v1151 = vadd.f32 0.0, %v1150
        %v1152 = vpop.f32.mrf.mxu0
        %1153 = vmatprep.mubr.bf16.mxu0 0
        %1154 = vmatmul.mubr.bf16.gmra.mxu0 %v1111
        %v1155 = vpop.f32.mrf.mxu0
        %v1156 = vadd.f32 0.0, %v1155
        %v1157 = vpop.f32.mrf.mxu0
        %v1158 = vpop.f32.mrf.mxu0
        %v1159 = vadd.f32 0.0, %v1158
        %v1160 = vpop.f32.mrf.mxu0
        %1161 = vdwg.mxu0
        %1162 = vrot.lane.b32.xlu0 %v1148, 16
        %v1163 = vpop.permute.xlu0 %1162
        %v1164 = vsel %vm516, %v1163, %v1148
        %1165 = vrot.lane.b32.xlu0 %v1151, 16
        %v1166 = vpop.permute.xlu0 %1165
        %v1167 = vsel %vm516, %v1166, %v1151
        %1168 = vrot.lane.b32.xlu0 %v1156, 16
        %v1169 = vpop.permute.xlu0 %1168
        %v1170 = vsel %vm516, %v1169, %v1156
        %1171 = vrot.lane.b32.xlu0 %v1159, 16
        %v1172 = vpop.permute.xlu0 %1171
        %v1173 = vsel %vm516, %v1172, %v1159
        %1174 = vrot.lane.b32.xlu0 %v1164, 16
        %v1175 = vpop.permute.xlu0 %1174
        %1176 = vrot.lane.b32.xlu0 %v1167, 16
        %v1177 = vpop.permute.xlu0 %1176
        %1178 = vrot.lane.b32.xlu0 %v1170, 16
        %v1179 = vpop.permute.xlu0 %1178
        %1180 = vrot.lane.b32.xlu0 %v1173, 16
        %v1181 = vpop.permute.xlu0 %1180
        %v1182 = vsel %vm516, %v1175, %v1148
        %v1183 = vsel %vm516, %v1177, %v1151
        %v1184 = vsel %vm516, %v1179, %v1156
        %v1185 = vsel %vm516, %v1181, %v1159
        %1190 = vrot.lane.b32.xlu0 %v1182, 127
        %v1191 = vpop.permute.xlu0 %1190
        %1192 = vrot.lane.b32.xlu0 %v1183, 127
        %v1193 = vpop.permute.xlu0 %1192
        %1194 = vrot.lane.b32.xlu0 %v1184, 127
        %v1195 = vpop.permute.xlu0 %1194
        %1196 = vrot.lane.b32.xlu0 %v1185, 127
        %v1197 = vpop.permute.xlu0 %1196
        %v1202 = vsel %vm738, 0.0, %v1191
        %v1203 = vsel %vm738, 0.0, %v1193
        %v1204 = vsel %vm738, 0.0, %v1195
        %v1205 = vsel %vm738, 0.0, %v1197
        %v1206 = vadd.f32 %v1088, %v1202
        %v1207 = vadd.f32 %v1089, %v1203
        %v1208 = vadd.f32 %v1090, %v1204
        %v1209 = vadd.f32 %v1091, %v1205
        %1211 = vset.pattern.permute.xlu0 0
        %1212 = vperm.xlu0 %1211, %v894
        %v1213 = vpop.permute.xlu0 %1212
        %1216 = vset.pattern.permute.xlu0 0
        %1217 = vperm.xlu0 %1216, %v895
        %v1218 = vpop.permute.xlu0 %1217
        %1221 = vset.pattern.permute.xlu0 0
        %1222 = vperm.xlu0 %1221, %v896
        %v1223 = vpop.permute.xlu0 %1222
        %1226 = vset.pattern.permute.xlu0 0
        %1227 = vperm.xlu0 %1226, %v897
        %v1228 = vpop.permute.xlu0 %1227
        %v1230 = vadd.f32 %v1206, %v1213
        %v1231 = vadd.f32 %v1207, %v1218
        %v1232 = vadd.f32 %v1208, %v1223
        %v1233 = vadd.f32 %v1209, %v1228
        %v1234 = vmax.f32 %v1230, 0.0
        %v1235 = vmax.f32 %v1231, 0.0
        %v1236 = vmax.f32 %v1232, 0.0
        %v1237 = vmax.f32 %v1233, 0.0
        %v1238 = vld [vmem:[%s8] sm:$0xff]
        %v1239 = vld [vmem:[%s8 + $0x8] sm:$0xff]
        %v1240 = vld [vmem:[%s8 + $0x10] sm:$0xff]
        %v1241 = vld [vmem:[%s8 + $0x18] sm:$0xff]
        %v1242 = vld [vmem:[%s9] sm:$0xff]
        %v1243 = vld [vmem:[%s9 + $0x8] sm:$0xff]
        %v1244 = vld [vmem:[%s9 + $0x10] sm:$0xff]
        %v1245 = vld [vmem:[%s9 + $0x18] sm:$0xff]
        %v1246 = vsel %vm460, %v1234, 0.0
        %v1247 = vsel %vm460, %v1235, 0.0
        %v1248 = vadd.f32 %v1246, %v1247
        %v1249 = vsel %vm460, %v1236, 0.0
        %v1250 = vadd.f32 %v1248, %v1249
        %v1251 = vsel %vm460, %v1237, 0.0
        %v1252 = vadd.f32 %v1250, %v1251
        %v1253 = vrot.slane %v1252, 4
        %v1254 = vadd.f32 %v1252, %v1253
        %v1255 = vrot.slane %v1254, 2
        %v1256 = vadd.f32 %v1254, %v1255
        %v1257 = vrot.slane %v1256, 1
        %v1258 = vadd.f32 %v1256, %v1257
        %v1259 = vmul.f32 %v1258, %v812
        %v1260 = vsub.f32 %v1234, %v1259
        %v1261 = vsub.f32 %v1235, %v1259
        %v1262 = vsub.f32 %v1236, %v1259
        %v1263 = vsub.f32 %v1237, %v1259
        %v1264 = vmul.f32 %v1260, %v1260
        %v1265 = vmul.f32 %v1261, %v1261
        %v1266 = vmul.f32 %v1262, %v1262
        %v1267 = vmul.f32 %v1263, %v1263
        %v1268 = vsel %vm460, %v1264, 0.0
        %v1269 = vsel %vm460, %v1265, 0.0
        %v1270 = vadd.f32 %v1268, %v1269
        %v1271 = vsel %vm460, %v1266, 0.0
        %v1272 = vadd.f32 %v1270, %v1271
        %v1273 = vsel %vm460, %v1267, 0.0
        %v1274 = vadd.f32 %v1272, %v1273
        %v1275 = vrot.slane %v1274, 4
        %v1276 = vadd.f32 %v1274, %v1275
        %v1277 = vrot.slane %v1276, 2
        %v1278 = vadd.f32 %v1276, %v1277
        %v1279 = vrot.slane %v1278, 1
        %v1280 = vadd.f32 %v1278, %v1279
        %v1281 = vmul.f32 %v1280, %v812
        %v1282 = vadd.f32 %v1281, 1e-05
        %v1283 = vrsqrt.pop %v1282
        %v1284 = vmul.f32 %v1260, %v1283
        %v1285 = vmul.f32 %v1261, %v1283
        %v1286 = vmul.f32 %v1262, %v1283
        %v1287 = vmul.f32 %v1263, %v1283
        %1289 = vset.pattern.permute.xlu0 0
        %1290 = vperm.xlu0 %1289, %v1238
        %v1291 = vpop.permute.xlu0 %1290
        %1294 = vset.pattern.permute.xlu0 0
        %1295 = vperm.xlu0 %1294, %v1239
        %v1296 = vpop.permute.xlu0 %1295
        %1299 = vset.pattern.permute.xlu0 0
        %1300 = vperm.xlu0 %1299, %v1240
        %v1301 = vpop.permute.xlu0 %1300
        %1304 = vset.pattern.permute.xlu0 0
        %1305 = vperm.xlu0 %1304, %v1241
        %v1306 = vpop.permute.xlu0 %1305
        %v1308 = vmul.f32 %v1284, %v1291
        %v1309 = vmul.f32 %v1285, %v1296
        %v1310 = vmul.f32 %v1286, %v1301
        %v1311 = vmul.f32 %v1287, %v1306
        %1313 = vset.pattern.permute.xlu0 0
        %1314 = vperm.xlu0 %1313, %v1242
        %v1315 = vpop.permute.xlu0 %1314
        %1318 = vset.pattern.permute.xlu0 0
        %1319 = vperm.xlu0 %1318, %v1243
        %v1320 = vpop.permute.xlu0 %1319
        %1323 = vset.pattern.permute.xlu0 0
        %1324 = vperm.xlu0 %1323, %v1244
        %v1325 = vpop.permute.xlu0 %1324
        %1328 = vset.pattern.permute.xlu0 0
        %1329 = vperm.xlu0 %1328, %v1245
        %v1330 = vpop.permute.xlu0 %1329
        %v1332 = vadd.f32 %v1308, %v1315
        %v1333 = vadd.f32 %v1309, %v1320
        %v1334 = vadd.f32 %v1310, %v1325
        %v1335 = vadd.f32 %v1311, %v1330
        %v1336 = vmul.f32 %v1332, %v437
        %v1337 = vmul.f32 %v1333, %v437
        %v1338 = vmul.f32 %v1334, %v437
        %v1339 = vmul.f32 %v1335, %v437
        %v1340 = vld [vmem:[%s10] sm:$0xff]
        %v1341 = vld [vmem:[%s10 + $0x8] sm:$0xff]
        %v1342 = vld [vmem:[%s10 + $0x10] sm:$0xff]
        %v1343 = vld [vmem:[%s10 + $0x18] sm:$0xff]
        %1345 = vset.pattern.permute.xlu0 0
        %1346 = vperm.xlu0 %1345, %v1340
        %v1347 = vpop.permute.xlu0 %1346
        %1350 = vset.pattern.permute.xlu0 0
        %1351 = vperm.xlu0 %1350, %v1341
        %v1352 = vpop.permute.xlu0 %1351
        %1355 = vset.pattern.permute.xlu0 0
        %1356 = vperm.xlu0 %1355, %v1342
        %v1357 = vpop.permute.xlu0 %1356
        %1360 = vset.pattern.permute.xlu0 0
        %1361 = vperm.xlu0 %1360, %v1343
        %v1362 = vpop.permute.xlu0 %1361
        %v1364 = vmul.f32 %v1336, %v1347
        %v1365 = vmul.f32 %v1337, %v1352
        %v1366 = vmul.f32 %v1338, %v1357
        %v1367 = vmul.f32 %v1339, %v1362
        %v1368 = vsel %vm460, %v1364, 0.0
        %v1369 = vsel %vm460, %v1365, 0.0
        %v1370 = vadd.f32 %v1368, %v1369
        %v1371 = vsel %vm460, %v1366, 0.0
        %v1372 = vadd.f32 %v1370, %v1371
        %v1373 = vsel %vm460, %v1367, 0.0
        %v1374 = vadd.f32 %v1372, %v1373
        %v1375 = vrot.slane %v1374, 4
        %v1376 = vadd.f32 %v1374, %v1375
        %v1377 = vrot.slane %v1376, 2
        %v1378 = vadd.f32 %v1376, %v1377
        %v1379 = vrot.slane %v1378, 1
        %v1380 = vadd.f32 %v1378, %v1379
        %v1381 = vld [vmem:[#allocation2] sm:$0x1]
        %1383 = vset.pattern.permute.xlu0 0
        %1384 = vperm.xlu0 %1383, %v1381
        %v1385 = vpop.permute.xlu0 %1384
        %v1387 = vlaneseq
        %v1388 = vshrl.u32 %v1387, 7
        %v1389 = vsub.s32 0, %v1388
        %v1390 = vrot.slane %v1385, %v1389
        %v1391 = vadd.f32 %v1380, %v1390
        %v1392 = vmul.f32 %v1391, %v430
        %vm1393 = vcmask 122880
        %1394 = vst.msk [vmem:[%s418] sm:$0x1] %vm1393, %v1392
        %s1395 = sand.u32 %s298, 1
        %s1396 = scalar_lea.sflag [#allocation4], %s1395
        %s1397 = sand.u32 %s298, 1
        %s1398 = scalar_lea.vmem [#allocation3], %s1397
        // Predicated region
        $region69: #{tpu_custom_call.1} parent=67 // pred_check
          %p1399 = pneg %p308
        $region70: #{tpu_custom_call.1} parent=67 // pred_check_branch
          %1401 = sbr.rel (%p1399) target = $region72
        $region71: #{tpu_custom_call.1} parent=67 // pred_region
          %s1403 = ssub.s32 16, 16
          %1404 = vsyncadd %s1396, %s1403
          %s1405 = smul.addr %s28, 16
          %s1406 = scalar_lea.hbm %s12, %s1405
          %s1408 = sshll.u32 %s1398, 4
          %s1409 = int_to_ptr.vmem [resolvable:$true] %s1408
          %1411 = dma.vmem_to_hbm [thread:$0]  %s1409, 16, %s1406, %s1396
        $region72: #{tpu_custom_call.1} parent=67 // pred_fallthru
          _
      $region68: #{tpu_custom_call.1} parent=5 // pred_fallthru
        _
      %p1412 = scmp.le.s32.totalorder 2, %s23
      // Predicated region
      $region73: #{tpu_custom_call.1} parent=5 // pred_check
        %p1413 = pneg %p1412
      $region74: #{tpu_custom_call.1} parent=5 // pred_check_branch
        %1415 = sbr.rel (%p1413) target = $region76
      $region75: #{tpu_custom_call.1} parent=5 // pred_region
        %s1416 = ssub.s32 %s23, 2
        // Predicated region
        $region77: #{tpu_custom_call.1} parent=75 // pred_check
          %p1417 = pneg %p314
        $region78: #{tpu_custom_call.1} parent=75 // pred_check_branch
          %1419 = sbr.rel (%p1417) target = $region80
        $region79: #{tpu_custom_call.1} parent=75 // pred_region
          %s1420 = sand.u32 %s299, 1
          %s1421 = scalar_lea.sflag [#allocation4], %s1420
          %s1422 = sand.u32 %s299, 1
          %s1423 = scalar_lea.vmem [#allocation3], %s1422
          %1424 = dma.done %s1421, 16
        $region80: #{tpu_custom_call.1} parent=75 // pred_fallthru
          _
      $region76: #{tpu_custom_call.1} parent=5 // pred_fallthru
        _
    $region6: #{tpu_custom_call.1} parent=1 // loop_footer
      %s27 = sadd.s32 1, %s23
    $region7: #{tpu_custom_call.1} parent=1 // loop_footer_branch
      %22 = sbr.rel target = $region3
    $region8: #{tpu_custom_call.1} parent=1 // loop_exit
      _
    %1425 = vsyncpa [#allocation4], 1
    %s1426 = scalar_lea.sflag [#allocation4], 1
    %1427 = vsyncpa %s1426, 1

</llo_original>
